<compile_context>
chip_gen: v7x
topology: tpu7x:2x2x1
jax: 0.10.0
libtpu: 0.0.40
codegen_flags: <defaults>
</compile_context>

<pallas_src>
import functools

import jax
import jax.numpy as jnp
import numpy as np
from jax.experimental import pallas as pl
from jax.experimental.pallas import tpu as pltpu

SCALE_ACTIVATION = 4.9   # config.SCALE_ACTIVATION (standard NEAT value)
# config.ACTIVATION -> sigmoid (standard NEAT default)

NPAD = 128    # hidden+output node-id space padded to one full lane register
K_PAD = 8     # input-node count padded to one sublane group (extra rows are zero)
BATCH = 512   # batched samples (each row == one forward() call)


def ffn_kernel(x_ref, wx_ref, c_ref, w_ref, om_ref, hm_ref, out_ref,
               xc_s, v_s, *, num_levels, out_start, num_outputs):
    """Propagate node values through the genome graph, level by level.

    x_ref:   (TB, K_PAD)          raw network inputs for TB samples
    wx_ref:  (K_PAD, NPAD)        input-node -> node weights (scale folded in)
    c_ref:   (1, NPAD)            bias-node contribution (scale folded in)
    w_ref:   (NPAD, NPAD)         hidden/output -> node weights (scale folded in)
    om_ref:  (num_levels, NPAD)   1 - mask  per topological level
    hm_ref:  (num_levels, NPAD)   0.5*mask  per topological level
    out_ref: (TB, num_outputs)    output-node values (contiguous column block)
    xc_s, v_s: (TB, NPAD) VMEM scratch (bounded vreg pressure across levels)
    """
    # Input/bias contribution to every node's pre-activation; constant across levels.
    xc = jnp.dot(x_ref[...], wx_ref[...],
                 preferred_element_type=jnp.float32) + c_ref[...]
    xc_s[...] = xc
    # Level 0: no hidden/output node has a value yet, so pre-activation == xc.
    # sigmoid(S*z) == 0.5*tanh((S/2)*z) + 0.5 and (S/2) is folded into the weights,
    # so the masked update collapses to hm*(tanh(xc)+1)  (hm==0 -> value stays 0).
    v_s[...] = hm_ref[0:1, :] * (jnp.tanh(xc) + 1.0)
    # Remaining topological levels (num_levels is a small compile-time constant).
    # TODO(synk): for deep genomes switch to lax.fori_loop with dynamic mask indexing.
    for lvl in range(1, num_levels):
        s = xc_s[...] + jnp.dot(v_s[...], w_ref[...],
                                preferred_element_type=jnp.float32)
        v_s[...] = (om_ref[lvl:lvl + 1, :] * v_s[...]
                    + hm_ref[lvl:lvl + 1, :] * (jnp.tanh(s) + 1.0))
    # Output nodes were re-mapped to a contiguous column block at genome build.
    out_ref[...] = v_s[:, out_start:out_start + num_outputs]


def _num_parallel_tiles():
    """2 batch tiles only on dual-TensorCore chips (v7x); 1 otherwise."""
    try:
        kind = jax.devices()[0].device_kind.lower()
    except Exception:
        return 1
    return 2 if ("v7" in kind or "7x" in kind) else 1


def make_forward(batch, k_pad, num_outputs, num_levels, out_start):
    num_tiles = _num_parallel_tiles()
    if batch % num_tiles != 0 or (batch // num_tiles) % 8 != 0:
        num_tiles = 1
    tb = batch // num_tiles

    kernel = functools.partial(ffn_kernel, num_levels=num_levels,
                               out_start=out_start, num_outputs=num_outputs)
    cost = pl.CostEstimate(
        flops=(2 * batch * NPAD * (k_pad + NPAD * max(num_levels - 1, 0))
               + 6 * batch * NPAD * num_levels),
        transcendentals=batch * NPAD * num_levels,
        bytes_accessed=4 * (batch * k_pad + batch * num_outputs
                            + k_pad * NPAD + NPAD * NPAD
                            + (1 + 2 * num_levels) * NPAD),
    )
    fwd = pl.pallas_call(
        kernel,
        out_shape=jax.ShapeDtypeStruct((batch, num_outputs), jnp.float32),
        grid=(num_tiles,),
        in_specs=[
            pl.BlockSpec((tb, k_pad), lambda i: (i, 0)),          # x: tiled over batch
            pl.BlockSpec((k_pad, NPAD), lambda i: (0, 0)),        # W_x: resident
            pl.BlockSpec((1, NPAD), lambda i: (0, 0)),            # bias row: resident
            pl.BlockSpec((NPAD, NPAD), lambda i: (0, 0)),         # W_rec: resident
            pl.BlockSpec((num_levels, NPAD), lambda i: (0, 0)),   # 1 - mask
            pl.BlockSpec((num_levels, NPAD), lambda i: (0, 0)),   # 0.5 * mask
        ],
        out_specs=pl.BlockSpec((tb, num_outputs), lambda i: (i, 0)),
        scratch_shapes=[pltpu.VMEM((tb, NPAD), jnp.float32),      # xc
                        pltpu.VMEM((tb, NPAD), jnp.float32)],     # v
        compiler_params=pltpu.CompilerParams(
            dimension_semantics=("parallel",)),
        cost_estimate=cost,
    )
    return jax.jit(fwd)


if __name__ == "__main__":
    # ---- deterministic synthetic genome -------------------------------------
    # node ids: 0,1,2 = inputs; 3 = bias; 4..7 = hidden; 8,9 = outputs
    input_ids = [0, 1, 2]
    bias_ids = [3]
    hidden_ids = [4, 5, 6, 7]
    output_ids = [8, 9]
    n_in, n_hid, n_out = len(input_ids), len(hidden_ids), len(output_ids)

    key = jax.random.PRNGKey(0)
    k_ih, k_ho, k_x = jax.random.split(key, 3)
    # connection weights: (inputs + bias) -> hidden, (hidden + bias) -> outputs
    w_ih = jax.random.normal(k_ih, (n_in + 1, n_hid), jnp.float32)
    w_ho = jax.random.normal(k_ho, (n_hid + 1, n_out), jnp.float32)
    x = jax.random.normal(k_x, (BATCH, n_in), jnp.float32)

    # ---- genome "compile": dense matrices over re-mapped internal columns ----
    # hidden nodes -> columns 0..n_hid-1, output nodes -> columns n_hid..n_hid+n_out-1
    col = {nid: i for i, nid in enumerate(hidden_ids)}
    col.update({nid: n_hid + i for i, nid in enumerate(output_ids)})
    out_start = n_hid

    scale = 0.5 * SCALE_ACTIVATION            # sigmoid(S*z) = 0.5*tanh((S/2)*z)+0.5
    w_ih_np = np.asarray(w_ih, np.float64)
    w_ho_np = np.asarray(w_ho, np.float64)

    W_x = np.zeros((K_PAD, NPAD), np.float32)   # input-node rows (x column == node id)
    c = np.zeros((1, NPAD), np.float32)         # bias-node contribution
    W = np.zeros((NPAD, NPAD), np.float32)      # hidden/output -> node weights
    for a, _src in enumerate(input_ids):              # inputs -> hidden
        for b, dst in enumerate(hidden_ids):
            W_x[a, col[dst]] = scale * w_ih_np[a, b]
    for b, dst in enumerate(hidden_ids):               # bias -> hidden
        c[0, col[dst]] = scale * w_ih_np[n_in, b]
    for a, src in enumerate(hidden_ids):               # hidden -> outputs
        for b, dst in enumerate(output_ids):
            W[col[src], col[dst]] = scale * w_ho_np[a, b]
    for b, dst in enumerate(output_ids):               # bias -> outputs
        c[0, col[dst]] = scale * w_ho_np[n_hid, b]

    # topological levels: level 0 evaluates hidden nodes, level 1 evaluates outputs
    num_levels = 2
    m = np.zeros((num_levels, NPAD), np.float32)
    for nid in hidden_ids:
        m[0, col[nid]] = 1.0
    for nid in output_ids:
        m[1, col[nid]] = 1.0
    one_minus_m = jnp.asarray(1.0 - m)
    half_m = jnp.asarray(0.5 * m)

    # x padded once at setup to a sublane-friendly K (padding columns hit zero rows)
    x_pad = jnp.pad(x, ((0, 0), (0, K_PAD - n_in)))

    # ---- run kernel ----------------------------------------------------------
    forward = make_forward(BATCH, K_PAD, n_out, num_levels, out_start)
    out = forward(x_pad, jnp.asarray(W_x), jnp.asarray(c), jnp.asarray(W),
                  one_minus_m, half_m)
    out = jax.block_until_ready(out)

    # ---- pure-numpy reference (same semantics as the PyTorch forward) -------
    def sigmoid(z):
        return 1.0 / (1.0 + np.exp(-z))

    xin = np.asarray(x, np.float64)
    h = sigmoid(SCALE_ACTIVATION * (xin @ w_ih_np[:n_in] + w_ih_np[n_in]))
    o_ref = sigmoid(SCALE_ACTIVATION * (h @ w_ho_np[:n_hid] + w_ho_np[n_hid]))

    np.testing.assert_allclose(np.asarray(out), o_ref, rtol=1e-4, atol=1e-5)
    assert out.shape == (BATCH, n_out)
    print("KERNEL_OK")
</pallas_src>

<mosaic_0001>
module attributes {stable_mosaic.version = 11 : i64} {
  func.func @ffn_kernel(%arg0: i32, %arg1: memref<512x8xf32, #tpu.memory_space<vmem>>, %arg2: memref<8x128xf32, #tpu.memory_space<vmem>>, %arg3: memref<1x128xf32, #tpu.memory_space<vmem>>, %arg4: memref<128x128xf32, #tpu.memory_space<vmem>>, %arg5: memref<2x128xf32, #tpu.memory_space<vmem>>, %arg6: memref<2x128xf32, #tpu.memory_space<vmem>>, %arg7: memref<512x2xf32, #tpu.memory_space<vmem>>, %arg8: memref<512x128xf32, #tpu.memory_space<vmem>>, %arg9: memref<512x128xf32, #tpu.memory_space<vmem>>) attributes {dimension_semantics = [#tpu.dimension_semantics<parallel>], iteration_bounds = array<i64: 1>, scalar_prefetch = 0 : i64, scratch_operands = 2 : i64, tpu.core_type = #tpu.core_type<tc>, window_params = [{transform_indices = @transform_0, window_bounds = array<i64: 512, 8>}, {pipeline_mode = #tpu.pipeline_mode<synchronous>, transform_indices = @transform_1, window_bounds = array<i64: 8, 128>}, {pipeline_mode = #tpu.pipeline_mode<synchronous>, transform_indices = @transform_2, window_bounds = array<i64: 1, 128>}, {pipeline_mode = #tpu.pipeline_mode<synchronous>, transform_indices = @transform_3, window_bounds = array<i64: 128, 128>}, {pipeline_mode = #tpu.pipeline_mode<synchronous>, transform_indices = @transform_4, window_bounds = array<i64: 2, 128>}, {pipeline_mode = #tpu.pipeline_mode<synchronous>, transform_indices = @transform_5, window_bounds = array<i64: 2, 128>}, {transform_indices = @transform_6, window_bounds = array<i64: 512, 2>}]} {
    %c0 = arith.constant 0 : index
    %c0_0 = arith.constant 0 : index
    %0 = vector.load %arg1[%c0, %c0_0] : memref<512x8xf32, #tpu.memory_space<vmem>>, vector<512x8xf32>
    %c0_1 = arith.constant 0 : index
    %c0_2 = arith.constant 0 : index
    %1 = vector.load %arg2[%c0_1, %c0_2] : memref<8x128xf32, #tpu.memory_space<vmem>>, vector<8x128xf32>
    %cst = arith.constant dense<0.000000e+00> : vector<512x128xf32>
    %2 = tpu.matmul %0, %1, %cst {dimension_numbers = #tpu.dot_dimension_numbers<[1], [0], [0], [1], [0, 0, 1, 1], [], []>} : vector<512x8xf32>, vector<8x128xf32>, vector<512x128xf32> -> vector<512x128xf32>
    %c0_3 = arith.constant 0 : index
    %c0_4 = arith.constant 0 : index
    %3 = vector.load %arg3[%c0_3, %c0_4] : memref<1x128xf32, #tpu.memory_space<vmem>>, vector<1x128xf32>
    %4 = vector.broadcast %3 : vector<1x128xf32> to vector<512x128xf32>
    %5 = arith.addf %2, %4 : vector<512x128xf32>
    %c0_5 = arith.constant 0 : index
    %c0_6 = arith.constant 0 : index
    %6 = vector.load %arg8[%c0_5, %c0_6] : memref<512x128xf32, #tpu.memory_space<vmem>>, vector<512x128xf32>
    tpu.vector_store %arg8[%c0_5, %c0_6], %5 {strides = array<i32>} : memref<512x128xf32, #tpu.memory_space<vmem>>, vector<512x128xf32>,
    %c0_7 = arith.constant 0 : index
    %c0_8 = arith.constant 0 : index
    %7 = vector.load %arg6[%c0_7, %c0_8] : memref<2x128xf32, #tpu.memory_space<vmem>>, vector<1x128xf32>
    %8 = math.tanh %5 : vector<512x128xf32>
    %cst_9 = arith.constant 1.000000e+00 : f32
    %9 = vector.broadcast %cst_9 : f32 to vector<512x128xf32>
    %10 = arith.addf %8, %9 : vector<512x128xf32>
    %11 = vector.broadcast %7 : vector<1x128xf32> to vector<512x128xf32>
    %12 = arith.mulf %11, %10 : vector<512x128xf32>
    %c0_10 = arith.constant 0 : index
    %c0_11 = arith.constant 0 : index
    %13 = vector.load %arg9[%c0_10, %c0_11] : memref<512x128xf32, #tpu.memory_space<vmem>>, vector<512x128xf32>
    tpu.vector_store %arg9[%c0_10, %c0_11], %12 {strides = array<i32>} : memref<512x128xf32, #tpu.memory_space<vmem>>, vector<512x128xf32>,
    %c0_12 = arith.constant 0 : index
    %c0_13 = arith.constant 0 : index
    %14 = vector.load %arg8[%c0_12, %c0_13] : memref<512x128xf32, #tpu.memory_space<vmem>>, vector<512x128xf32>
    %c0_14 = arith.constant 0 : index
    %c0_15 = arith.constant 0 : index
    %15 = vector.load %arg9[%c0_14, %c0_15] : memref<512x128xf32, #tpu.memory_space<vmem>>, vector<512x128xf32>
    %c0_16 = arith.constant 0 : index
    %c0_17 = arith.constant 0 : index
    %16 = vector.load %arg4[%c0_16, %c0_17] : memref<128x128xf32, #tpu.memory_space<vmem>>, vector<128x128xf32>
    %cst_18 = arith.constant dense<0.000000e+00> : vector<512x128xf32>
    %17 = tpu.matmul %15, %16, %cst_18 {dimension_numbers = #tpu.dot_dimension_numbers<[1], [0], [0], [1], [0, 0, 1, 1], [], []>} : vector<512x128xf32>, vector<128x128xf32>, vector<512x128xf32> -> vector<512x128xf32>
    %18 = arith.addf %14, %17 : vector<512x128xf32>
    %c1 = arith.constant 1 : index
    %c0_19 = arith.constant 0 : index
    %19 = vector.load %arg5[%c1, %c0_19] : memref<2x128xf32, #tpu.memory_space<vmem>>, vector<1x128xf32>
    %c0_20 = arith.constant 0 : index
    %c0_21 = arith.constant 0 : index
    %20 = vector.load %arg9[%c0_20, %c0_21] : memref<512x128xf32, #tpu.memory_space<vmem>>, vector<512x128xf32>
    %21 = vector.broadcast %19 : vector<1x128xf32> to vector<512x128xf32>
    %22 = arith.mulf %21, %20 : vector<512x128xf32>
    %c1_22 = arith.constant 1 : index
    %c0_23 = arith.constant 0 : index
    %23 = vector.load %arg6[%c1_22, %c0_23] : memref<2x128xf32, #tpu.memory_space<vmem>>, vector<1x128xf32>
    %24 = math.tanh %18 : vector<512x128xf32>
    %cst_24 = arith.constant 1.000000e+00 : f32
    %25 = vector.broadcast %cst_24 : f32 to vector<512x128xf32>
    %26 = arith.addf %24, %25 : vector<512x128xf32>
    %27 = vector.broadcast %23 : vector<1x128xf32> to vector<512x128xf32>
    %28 = arith.mulf %27, %26 : vector<512x128xf32>
    %29 = arith.addf %22, %28 : vector<512x128xf32>
    %c0_25 = arith.constant 0 : index
    %c0_26 = arith.constant 0 : index
    %30 = vector.load %arg9[%c0_25, %c0_26] : memref<512x128xf32, #tpu.memory_space<vmem>>, vector<512x128xf32>
    tpu.vector_store %arg9[%c0_25, %c0_26], %29 {strides = array<i32>} : memref<512x128xf32, #tpu.memory_space<vmem>>, vector<512x128xf32>,
    %c0_27 = arith.constant 0 : index
    %c4 = arith.constant 4 : index
    %31 = vector.load %arg9[%c0_27, %c4] : memref<512x128xf32, #tpu.memory_space<vmem>>, vector<512x2xf32>
    %c0_28 = arith.constant 0 : index
    %c0_29 = arith.constant 0 : index
    %32 = vector.load %arg7[%c0_28, %c0_29] : memref<512x2xf32, #tpu.memory_space<vmem>>, vector<512x2xf32>
    tpu.vector_store %arg7[%c0_28, %c0_29], %31 {strides = array<i32>} : memref<512x2xf32, #tpu.memory_space<vmem>>, vector<512x2xf32>,
    return
  }
  func.func @transform_0(%arg0: i32) -> (i32, i32) {
    %c0_i32 = arith.constant 0 : i32
    %c0_i32_0 = arith.constant 0 : i32
    return %arg0, %c0_i32 : i32, i32
  }
  func.func @transform_1(%arg0: i32) -> (i32, i32) {
    %c0_i32 = arith.constant 0 : i32
    %c0_i32_0 = arith.constant 0 : i32
    %c0_i32_1 = arith.constant 0 : i32
    return %c0_i32, %c0_i32_0 : i32, i32
  }
  func.func @transform_2(%arg0: i32) -> (i32, i32) {
    %c0_i32 = arith.constant 0 : i32
    %c0_i32_0 = arith.constant 0 : i32
    %c0_i32_1 = arith.constant 0 : i32
    return %c0_i32, %c0_i32_0 : i32, i32
  }
  func.func @transform_3(%arg0: i32) -> (i32, i32) {
    %c0_i32 = arith.constant 0 : i32
    %c0_i32_0 = arith.constant 0 : i32
    %c0_i32_1 = arith.constant 0 : i32
    return %c0_i32, %c0_i32_0 : i32, i32
  }
  func.func @transform_4(%arg0: i32) -> (i32, i32) {
    %c0_i32 = arith.constant 0 : i32
    %c0_i32_0 = arith.constant 0 : i32
    %c0_i32_1 = arith.constant 0 : i32
    return %c0_i32, %c0_i32_0 : i32, i32
  }
  func.func @transform_5(%arg0: i32) -> (i32, i32) {
    %c0_i32 = arith.constant 0 : i32
    %c0_i32_0 = arith.constant 0 : i32
    %c0_i32_1 = arith.constant 0 : i32
    return %c0_i32, %c0_i32_0 : i32, i32
  }
  func.func @transform_6(%arg0: i32) -> (i32, i32) {
    %c0_i32 = arith.constant 0 : i32
    %c0_i32_0 = arith.constant 0 : i32
    return %arg0, %c0_i32 : i32, i32
  }
}

</mosaic_0001>

<llo_original>
// kernel: tpu_custom_call.1
$region0: #{tpu_custom_call.1}
  #allocation0 [shape = 'u32[]', space=smem, size = 0x4, offset = 0x4, fixed_abs, tag = 'smem constant byte address 0x4 - core index']
  #allocation1 [shape = 'u32[144,128]{1,0:T(1,128)}', space=vmem, size = 0x12000, scoped, tag = 'internal scratch']
  #allocation2 [shape = 'f32[512,128]{1,0:T(8,128)}', space=vmem, size = 0x40000, scoped, tag = 'scratch operand']
  #allocation3 [shape = 'f32[512,128]{1,0:T(8,128)}', space=vmem, size = 0x40000, scoped, tag = 'scratch operand']
  %s0 = inlined_call_operand.vmem [shape: f32[512,8], index: 0, kind: input, shape index: {}]
  %s1 = inlined_call_operand.vmem [shape: f32[8,128], index: 1, kind: input, shape index: {}]
  %s2 = inlined_call_operand.vmem [shape: f32[1,128], index: 2, kind: input, shape index: {}]
  %s3 = inlined_call_operand.vmem [shape: f32[128,128], index: 3, kind: input, shape index: {}]
  %s4 = inlined_call_operand.vmem [shape: f32[2,128], index: 4, kind: input, shape index: {}]
  %s5 = inlined_call_operand.vmem [shape: f32[2,128], index: 5, kind: input, shape index: {}]
  %s6 = inlined_call_operand.vmem [shape: f32[512,2], index: 6, kind: output, shape index: {}]
  %s7 = sld [smem:[#allocation0]]
  $region34: #{tpu_custom_call.1} parent=0
    _
  %s9 = ssub.s32 1, %s7
  %s10 = scalar_select 0, %s9, %s7
  // Predicated region
  $region2: #{tpu_custom_call.1} parent=0 // pred_check
    _
  $region3: #{tpu_custom_call.1} parent=0 // pred_check_branch
    %12 = sbr.rel (0) target = $region5
  $region4: #{tpu_custom_call.1} parent=0 // pred_region
    _
  $region5: #{tpu_custom_call.1} parent=0 // pred_fallthru
    _
  // Predicated region
  $region6: #{tpu_custom_call.1} parent=0 // pred_check
    _
  $region7: #{tpu_custom_call.1} parent=0 // pred_check_branch
    %14 = sbr.rel (0) target = $region9
  $region8: #{tpu_custom_call.1} parent=0 // pred_region
    _
  $region9: #{tpu_custom_call.1} parent=0 // pred_fallthru
    _
  // Predicated region
  $region10: #{tpu_custom_call.1} parent=0 // pred_check
    _
  $region11: #{tpu_custom_call.1} parent=0 // pred_check_branch
    %16 = sbr.rel (0) target = $region13
  $region12: #{tpu_custom_call.1} parent=0 // pred_region
    _
  $region13: #{tpu_custom_call.1} parent=0 // pred_fallthru
    _
  // Predicated region
  $region14: #{tpu_custom_call.1} parent=0 // pred_check
    _
  $region15: #{tpu_custom_call.1} parent=0 // pred_check_branch
    %18 = sbr.rel (0) target = $region17
  $region16: #{tpu_custom_call.1} parent=0 // pred_region
    _
  $region17: #{tpu_custom_call.1} parent=0 // pred_fallthru
    _
  // Predicated region
  $region18: #{tpu_custom_call.1} parent=0 // pred_check
    _
  $region19: #{tpu_custom_call.1} parent=0 // pred_check_branch
    %20 = sbr.rel (0) target = $region21
  $region20: #{tpu_custom_call.1} parent=0 // pred_region
    _
  $region21: #{tpu_custom_call.1} parent=0 // pred_fallthru
    _
  // Predicated region
  $region22: #{tpu_custom_call.1} parent=0 // pred_check
    _
  $region23: #{tpu_custom_call.1} parent=0 // pred_check_branch
    %22 = sbr.rel (0) target = $region25
  $region24: #{tpu_custom_call.1} parent=0 // pred_region
    _
  $region25: #{tpu_custom_call.1} parent=0 // pred_fallthru
    _
  %v23 = vld [vmem:[%s0] sm:$0xff]
  %v24 = vld [vmem:[%s0 + $0x8] sm:$0xff]
  %v25 = vld [vmem:[%s0 + $0x10] sm:$0xff]
  %v26 = vld [vmem:[%s0 + $0x18] sm:$0xff]
  %v27 = vld [vmem:[%s0 + $0x20] sm:$0xff]
  %v28 = vld [vmem:[%s0 + $0x28] sm:$0xff]
  %v29 = vld [vmem:[%s0 + $0x30] sm:$0xff]
  %v30 = vld [vmem:[%s0 + $0x38] sm:$0xff]
  %v31 = vld [vmem:[%s0 + $0x40] sm:$0xff]
  %v32 = vld [vmem:[%s0 + $0x48] sm:$0xff]
  %v33 = vld [vmem:[%s0 + $0x50] sm:$0xff]
  %v34 = vld [vmem:[%s0 + $0x58] sm:$0xff]
  %v35 = vld [vmem:[%s0 + $0x60] sm:$0xff]
  %v36 = vld [vmem:[%s0 + $0x68] sm:$0xff]
  %v37 = vld [vmem:[%s0 + $0x70] sm:$0xff]
  %v38 = vld [vmem:[%s0 + $0x78] sm:$0xff]
  %v39 = vld [vmem:[%s0 + $0x80] sm:$0xff]
  %v40 = vld [vmem:[%s0 + $0x88] sm:$0xff]
  %v41 = vld [vmem:[%s0 + $0x90] sm:$0xff]
  %v42 = vld [vmem:[%s0 + $0x98] sm:$0xff]
  %v43 = vld [vmem:[%s0 + $0xa0] sm:$0xff]
  %v44 = vld [vmem:[%s0 + $0xa8] sm:$0xff]
  %v45 = vld [vmem:[%s0 + $0xb0] sm:$0xff]
  %v46 = vld [vmem:[%s0 + $0xb8] sm:$0xff]
  %v47 = vld [vmem:[%s0 + $0xc0] sm:$0xff]
  %v48 = vld [vmem:[%s0 + $0xc8] sm:$0xff]
  %v49 = vld [vmem:[%s0 + $0xd0] sm:$0xff]
  %v50 = vld [vmem:[%s0 + $0xd8] sm:$0xff]
  %v51 = vld [vmem:[%s0 + $0xe0] sm:$0xff]
  %v52 = vld [vmem:[%s0 + $0xe8] sm:$0xff]
  %v53 = vld [vmem:[%s0 + $0xf0] sm:$0xff]
  %v54 = vld [vmem:[%s0 + $0xf8] sm:$0xff]
  %v55 = vld [vmem:[%s0 + $0x100] sm:$0xff]
  %v56 = vld [vmem:[%s0 + $0x108] sm:$0xff]
  %v57 = vld [vmem:[%s0 + $0x110] sm:$0xff]
  %v58 = vld [vmem:[%s0 + $0x118] sm:$0xff]
  %v59 = vld [vmem:[%s0 + $0x120] sm:$0xff]
  %v60 = vld [vmem:[%s0 + $0x128] sm:$0xff]
  %v61 = vld [vmem:[%s0 + $0x130] sm:$0xff]
  %v62 = vld [vmem:[%s0 + $0x138] sm:$0xff]
  %v63 = vld [vmem:[%s0 + $0x140] sm:$0xff]
  %v64 = vld [vmem:[%s0 + $0x148] sm:$0xff]
  %v65 = vld [vmem:[%s0 + $0x150] sm:$0xff]
  %v66 = vld [vmem:[%s0 + $0x158] sm:$0xff]
  %v67 = vld [vmem:[%s0 + $0x160] sm:$0xff]
  %v68 = vld [vmem:[%s0 + $0x168] sm:$0xff]
  %v69 = vld [vmem:[%s0 + $0x170] sm:$0xff]
  %v70 = vld [vmem:[%s0 + $0x178] sm:$0xff]
  %v71 = vld [vmem:[%s0 + $0x180] sm:$0xff]
  %v72 = vld [vmem:[%s0 + $0x188] sm:$0xff]
  %v73 = vld [vmem:[%s0 + $0x190] sm:$0xff]
  %v74 = vld [vmem:[%s0 + $0x198] sm:$0xff]
  %v75 = vld [vmem:[%s0 + $0x1a0] sm:$0xff]
  %v76 = vld [vmem:[%s0 + $0x1a8] sm:$0xff]
  %v77 = vld [vmem:[%s0 + $0x1b0] sm:$0xff]
  %v78 = vld [vmem:[%s0 + $0x1b8] sm:$0xff]
  %v79 = vld [vmem:[%s0 + $0x1c0] sm:$0xff]
  %v80 = vld [vmem:[%s0 + $0x1c8] sm:$0xff]
  %v81 = vld [vmem:[%s0 + $0x1d0] sm:$0xff]
  %v82 = vld [vmem:[%s0 + $0x1d8] sm:$0xff]
  %v83 = vld [vmem:[%s0 + $0x1e0] sm:$0xff]
  %v84 = vld [vmem:[%s0 + $0x1e8] sm:$0xff]
  %v85 = vld [vmem:[%s0 + $0x1f0] sm:$0xff]
  %v86 = vld [vmem:[%s0 + $0x1f8] sm:$0xff]
  %v87 = vld [vmem:[%s1] sm:$0xff]
  %v88 = vld [vmem:[%s2] sm:$0x1]
  %v90 = vlaneseq
  %v91 = vshrl.u32 %v90, 7
  %v92 = vsub.s32 0, %v91
  %v93 = vrot.slane %v88, %v92
  %vm95 = vcmask 64512
  %v97 = vsel %vm95, %v23, 0
  %v100 = vsel %vm95, %v24, 0
  %v103 = vsel %vm95, %v25, 0
  %v106 = vsel %vm95, %v26, 0
  %v109 = vsel %vm95, %v27, 0
  %v112 = vsel %vm95, %v28, 0
  %v115 = vsel %vm95, %v29, 0
  %v118 = vsel %vm95, %v30, 0
  %v121 = vsel %vm95, %v31, 0
  %v124 = vsel %vm95, %v32, 0
  %v127 = vsel %vm95, %v33, 0
  %v130 = vsel %vm95, %v34, 0
  %v133 = vsel %vm95, %v35, 0
  %v136 = vsel %vm95, %v36, 0
  %v139 = vsel %vm95, %v37, 0
  %v142 = vsel %vm95, %v38, 0
  %v145 = vsel %vm95, %v39, 0
  %v148 = vsel %vm95, %v40, 0
  %v151 = vsel %vm95, %v41, 0
  %v154 = vsel %vm95, %v42, 0
  %v157 = vsel %vm95, %v43, 0
  %v160 = vsel %vm95, %v44, 0
  %v163 = vsel %vm95, %v45, 0
  %v166 = vsel %vm95, %v46, 0
  %v169 = vsel %vm95, %v47, 0
  %v172 = vsel %vm95, %v48, 0
  %v175 = vsel %vm95, %v49, 0
  %v178 = vsel %vm95, %v50, 0
  %v181 = vsel %vm95, %v51, 0
  %v184 = vsel %vm95, %v52, 0
  %v187 = vsel %vm95, %v53, 0
  %v190 = vsel %vm95, %v54, 0
  %v193 = vsel %vm95, %v55, 0
  %v196 = vsel %vm95, %v56, 0
  %v199 = vsel %vm95, %v57, 0
  %v202 = vsel %vm95, %v58, 0
  %v205 = vsel %vm95, %v59, 0
  %v208 = vsel %vm95, %v60, 0
  %v211 = vsel %vm95, %v61, 0
  %v214 = vsel %vm95, %v62, 0
  %v217 = vsel %vm95, %v63, 0
  %v220 = vsel %vm95, %v64, 0
  %v223 = vsel %vm95, %v65, 0
  %v226 = vsel %vm95, %v66, 0
  %v229 = vsel %vm95, %v67, 0
  %v232 = vsel %vm95, %v68, 0
  %v235 = vsel %vm95, %v69, 0
  %v238 = vsel %vm95, %v70, 0
  %v241 = vsel %vm95, %v71, 0
  %v244 = vsel %vm95, %v72, 0
  %v247 = vsel %vm95, %v73, 0
  %v250 = vsel %vm95, %v74, 0
  %v253 = vsel %vm95, %v75, 0
  %v256 = vsel %vm95, %v76, 0
  %v259 = vsel %vm95, %v77, 0
  %v262 = vsel %vm95, %v78, 0
  %v265 = vsel %vm95, %v79, 0
  %v268 = vsel %vm95, %v80, 0
  %v271 = vsel %vm95, %v81, 0
  %v274 = vsel %vm95, %v82, 0
  %v277 = vsel %vm95, %v83, 0
  %v280 = vsel %vm95, %v84, 0
  %v283 = vsel %vm95, %v85, 0
  %v286 = vsel %vm95, %v86, 0
  %288 = vmatprep.subr.mxu0 0.0
  %289 = vmatpush1.msra.mxu0 %v87
  %290 = vmatprep.subr.mxu0 0.0
  %291 = vmatpush1.msra.mxu0 0.0
  %292 = vmatprep.subr.mxu0 0.0
  %293 = vmatpush1.msra.mxu0 0.0
  %294 = vmatprep.subr.mxu0 0.0
  %295 = vmatpush1.msra.mxu0 0.0
  %296 = vmatprep.subr.mxu0 0.0
  %297 = vmatpush1.msra.mxu0 0.0
  %298 = vmatprep.subr.mxu0 0.0
  %299 = vmatpush1.msra.mxu0 0.0
  %300 = vmatprep.subr.mxu0 0.0
  %301 = vmatpush1.msra.mxu0 0.0
  %302 = vmatprep.subr.mxu0 0.0
  %303 = vmatpush1.msra.mxu0 0.0
  %304 = vmatprep.subr.mxu0 0.0
  %305 = vmatpush1.msra.mxu0 0.0
  %306 = vmatprep.subr.mxu0 0.0
  %307 = vmatpush1.msra.mxu0 0.0
  %308 = vmatprep.subr.mxu0 0.0
  %309 = vmatpush1.msra.mxu0 0.0
  %310 = vmatprep.subr.mxu0 0.0
  %311 = vmatpush1.msra.mxu0 0.0
  %312 = vmatprep.subr.mxu0 0.0
  %313 = vmatpush1.msra.mxu0 0.0
  %314 = vmatprep.subr.mxu0 0.0
  %315 = vmatpush1.msra.mxu0 0.0
  %316 = vmatprep.subr.mxu0 0.0
  %317 = vmatpush1.msra.mxu0 0.0
  %318 = vmatprep.subr.mxu0 0.0
  %319 = vmatpush1.msra.mxu0 0.0
  %320 = vmatprep.subr.mxu0 0.0
  %321 = vmatpush1.msra.mxu0 0.0
  %322 = vmatprep.subr.mxu0 0.0
  %323 = vmatpush1.msra.mxu0 0.0
  %324 = vmatprep.subr.mxu0 0.0
  %325 = vmatpush1.msra.mxu0 0.0
  %326 = vmatprep.subr.mxu0 0.0
  %327 = vmatpush1.msra.mxu0 0.0
  %328 = vmatprep.subr.mxu0 0.0
  %329 = vmatpush1.msra.mxu0 0.0
  %330 = vmatprep.subr.mxu0 0.0
  %331 = vmatpush1.msra.mxu0 0.0
  %332 = vmatprep.subr.mxu0 0.0
  %333 = vmatpush1.msra.mxu0 0.0
  %334 = vmatprep.subr.mxu0 0.0
  %335 = vmatpush1.msra.mxu0 0.0
  %336 = vmatprep.subr.mxu0 0.0
  %337 = vmatpush1.msra.mxu0 0.0
  %338 = vmatprep.subr.mxu0 0.0
  %339 = vmatpush1.msra.mxu0 0.0
  %340 = vmatprep.subr.mxu0 0.0
  %341 = vmatpush1.msra.mxu0 0.0
  %342 = vmatprep.subr.mxu0 0.0
  %343 = vmatpush1.msra.mxu0 0.0
  %344 = vmatprep.subr.mxu0 0.0
  %345 = vmatpush1.msra.mxu0 0.0
  %346 = vmatprep.subr.mxu0 0.0
  %347 = vmatpush1.msra.mxu0 0.0
  %348 = vmatprep.subr.mxu0 0.0
  %349 = vmatpush1.msra.mxu0 0.0
  %350 = vmatprep.subr.mxu0 0.0
  %351 = vmatpush1.msra.mxu0 0.0
  %352 = vmatprep.mubr.f32.mxu0 0.0
  %353 = vmatmul.mubr.f32.gmra.mrb[0].mxu0 %v97
  %v354 = vpop.f32.mrb[0].mxu0
  %v355 = vadd.f32 %v93, %v354
  %v356 = vpop.f32.mrb[0].mxu0
  %357 = vmatprep.mubr.f32.mxu0 0.0
  %358 = vmatmul.mubr.f32.gmra.mrb[0].mxu0 %v100
  %v359 = vpop.f32.mrb[0].mxu0
  %v360 = vadd.f32 %v93, %v359
  %v361 = vpop.f32.mrb[0].mxu0
  %362 = vmatprep.mubr.f32.mxu0 0.0
  %363 = vmatmul.mubr.f32.gmra.mrb[0].mxu0 %v103
  %v364 = vpop.f32.mrb[0].mxu0
  %v365 = vadd.f32 %v93, %v364
  %v366 = vpop.f32.mrb[0].mxu0
  %367 = vmatprep.mubr.f32.mxu0 0.0
  %368 = vmatmul.mubr.f32.gmra.mrb[0].mxu0 %v106
  %v369 = vpop.f32.mrb[0].mxu0
  %v370 = vadd.f32 %v93, %v369
  %v371 = vpop.f32.mrb[0].mxu0
  %372 = vmatprep.mubr.f32.mxu0 0.0
  %373 = vmatmul.mubr.f32.gmra.mrb[0].mxu0 %v109
  %v374 = vpop.f32.mrb[0].mxu0
  %v375 = vadd.f32 %v93, %v374
  %v376 = vpop.f32.mrb[0].mxu0
  %377 = vmatprep.mubr.f32.mxu0 0.0
  %378 = vmatmul.mubr.f32.gmra.mrb[0].mxu0 %v112
  %v379 = vpop.f32.mrb[0].mxu0
  %v380 = vadd.f32 %v93, %v379
  %v381 = vpop.f32.mrb[0].mxu0
  %382 = vmatprep.mubr.f32.mxu0 0.0
  %383 = vmatmul.mubr.f32.gmra.mrb[0].mxu0 %v115
  %v384 = vpop.f32.mrb[0].mxu0
  %v385 = vadd.f32 %v93, %v384
  %v386 = vpop.f32.mrb[0].mxu0
  %387 = vmatprep.mubr.f32.mxu0 0.0
  %388 = vmatmul.mubr.f32.gmra.mrb[0].mxu0 %v118
  %v389 = vpop.f32.mrb[0].mxu0
  %v390 = vadd.f32 %v93, %v389
  %v391 = vpop.f32.mrb[0].mxu0
  %392 = vmatprep.mubr.f32.mxu0 0.0
  %393 = vmatmul.mubr.f32.gmra.mrb[0].mxu0 %v121
  %v394 = vpop.f32.mrb[0].mxu0
  %v395 = vadd.f32 %v93, %v394
  %v396 = vpop.f32.mrb[0].mxu0
  %397 = vmatprep.mubr.f32.mxu0 0.0
  %398 = vmatmul.mubr.f32.gmra.mrb[0].mxu0 %v124
  %v399 = vpop.f32.mrb[0].mxu0
  %v400 = vadd.f32 %v93, %v399
  %v401 = vpop.f32.mrb[0].mxu0
  %402 = vmatprep.mubr.f32.mxu0 0.0
  %403 = vmatmul.mubr.f32.gmra.mrb[0].mxu0 %v127
  %v404 = vpop.f32.mrb[0].mxu0
  %v405 = vadd.f32 %v93, %v404
  %v406 = vpop.f32.mrb[0].mxu0
  %407 = vmatprep.mubr.f32.mxu0 0.0
  %408 = vmatmul.mubr.f32.gmra.mrb[0].mxu0 %v130
  %v409 = vpop.f32.mrb[0].mxu0
  %v410 = vadd.f32 %v93, %v409
  %v411 = vpop.f32.mrb[0].mxu0
  %412 = vmatprep.mubr.f32.mxu0 0.0
  %413 = vmatmul.mubr.f32.gmra.mrb[0].mxu0 %v133
  %v414 = vpop.f32.mrb[0].mxu0
  %v415 = vadd.f32 %v93, %v414
  %v416 = vpop.f32.mrb[0].mxu0
  %417 = vmatprep.mubr.f32.mxu0 0.0
  %418 = vmatmul.mubr.f32.gmra.mrb[0].mxu0 %v136
  %v419 = vpop.f32.mrb[0].mxu0
  %v420 = vadd.f32 %v93, %v419
  %v421 = vpop.f32.mrb[0].mxu0
  %422 = vmatprep.mubr.f32.mxu0 0.0
  %423 = vmatmul.mubr.f32.gmra.mrb[0].mxu0 %v139
  %v424 = vpop.f32.mrb[0].mxu0
  %v425 = vadd.f32 %v93, %v424
  %v426 = vpop.f32.mrb[0].mxu0
  %427 = vmatprep.mubr.f32.mxu0 0.0
  %428 = vmatmul.mubr.f32.gmra.mrb[0].mxu0 %v142
  %v429 = vpop.f32.mrb[0].mxu0
  %v430 = vadd.f32 %v93, %v429
  %v431 = vpop.f32.mrb[0].mxu0
  %432 = vmatprep.mubr.f32.mxu0 0.0
  %433 = vmatmul.mubr.f32.gmra.mrb[0].mxu0 %v145
  %v434 = vpop.f32.mrb[0].mxu0
  %v435 = vadd.f32 %v93, %v434
  %v436 = vpop.f32.mrb[0].mxu0
  %437 = vmatprep.mubr.f32.mxu0 0.0
  %438 = vmatmul.mubr.f32.gmra.mrb[0].mxu0 %v148
  %v439 = vpop.f32.mrb[0].mxu0
  %v440 = vadd.f32 %v93, %v439
  %v441 = vpop.f32.mrb[0].mxu0
  %442 = vmatprep.mubr.f32.mxu0 0.0
  %443 = vmatmul.mubr.f32.gmra.mrb[0].mxu0 %v151
  %v444 = vpop.f32.mrb[0].mxu0
  %v445 = vadd.f32 %v93, %v444
  %v446 = vpop.f32.mrb[0].mxu0
  %447 = vmatprep.mubr.f32.mxu0 0.0
  %448 = vmatmul.mubr.f32.gmra.mrb[0].mxu0 %v154
  %v449 = vpop.f32.mrb[0].mxu0
  %v450 = vadd.f32 %v93, %v449
  %v451 = vpop.f32.mrb[0].mxu0
  %452 = vmatprep.mubr.f32.mxu0 0.0
  %453 = vmatmul.mubr.f32.gmra.mrb[0].mxu0 %v157
  %v454 = vpop.f32.mrb[0].mxu0
  %v455 = vadd.f32 %v93, %v454
  %v456 = vpop.f32.mrb[0].mxu0
  %457 = vmatprep.mubr.f32.mxu0 0.0
  %458 = vmatmul.mubr.f32.gmra.mrb[0].mxu0 %v160
  %v459 = vpop.f32.mrb[0].mxu0
  %v460 = vadd.f32 %v93, %v459
  %v461 = vpop.f32.mrb[0].mxu0
  %462 = vmatprep.mubr.f32.mxu0 0.0
  %463 = vmatmul.mubr.f32.gmra.mrb[0].mxu0 %v163
  %v464 = vpop.f32.mrb[0].mxu0
  %v465 = vadd.f32 %v93, %v464
  %v466 = vpop.f32.mrb[0].mxu0
  %467 = vmatprep.mubr.f32.mxu0 0.0
  %468 = vmatmul.mubr.f32.gmra.mrb[0].mxu0 %v166
  %v469 = vpop.f32.mrb[0].mxu0
  %v470 = vadd.f32 %v93, %v469
  %v471 = vpop.f32.mrb[0].mxu0
  %472 = vmatprep.mubr.f32.mxu0 0.0
  %473 = vmatmul.mubr.f32.gmra.mrb[0].mxu0 %v169
  %v474 = vpop.f32.mrb[0].mxu0
  %v475 = vadd.f32 %v93, %v474
  %v476 = vpop.f32.mrb[0].mxu0
  %477 = vmatprep.mubr.f32.mxu0 0.0
  %478 = vmatmul.mubr.f32.gmra.mrb[0].mxu0 %v172
  %v479 = vpop.f32.mrb[0].mxu0
  %v480 = vadd.f32 %v93, %v479
  %v481 = vpop.f32.mrb[0].mxu0
  %482 = vmatprep.mubr.f32.mxu0 0.0
  %483 = vmatmul.mubr.f32.gmra.mrb[0].mxu0 %v175
  %v484 = vpop.f32.mrb[0].mxu0
  %v485 = vadd.f32 %v93, %v484
  %v486 = vpop.f32.mrb[0].mxu0
  %487 = vmatprep.mubr.f32.mxu0 0.0
  %488 = vmatmul.mubr.f32.gmra.mrb[0].mxu0 %v178
  %v489 = vpop.f32.mrb[0].mxu0
  %v490 = vadd.f32 %v93, %v489
  %v491 = vpop.f32.mrb[0].mxu0
  %492 = vmatprep.mubr.f32.mxu0 0.0
  %493 = vmatmul.mubr.f32.gmra.mrb[0].mxu0 %v181
  %v494 = vpop.f32.mrb[0].mxu0
  %v495 = vadd.f32 %v93, %v494
  %v496 = vpop.f32.mrb[0].mxu0
  %497 = vmatprep.mubr.f32.mxu0 0.0
  %498 = vmatmul.mubr.f32.gmra.mrb[0].mxu0 %v184
  %v499 = vpop.f32.mrb[0].mxu0
  %v500 = vadd.f32 %v93, %v499
  %v501 = vpop.f32.mrb[0].mxu0
  %502 = vmatprep.mubr.f32.mxu0 0.0
  %503 = vmatmul.mubr.f32.gmra.mrb[0].mxu0 %v187
  %v504 = vpop.f32.mrb[0].mxu0
  %v505 = vadd.f32 %v93, %v504
  %v506 = vpop.f32.mrb[0].mxu0
  %507 = vmatprep.mubr.f32.mxu0 0.0
  %508 = vmatmul.mubr.f32.gmra.mrb[0].mxu0 %v190
  %v509 = vpop.f32.mrb[0].mxu0
  %v510 = vadd.f32 %v93, %v509
  %v511 = vpop.f32.mrb[0].mxu0
  %512 = vmatprep.mubr.f32.mxu0 0.0
  %513 = vmatmul.mubr.f32.gmra.mrb[0].mxu0 %v193
  %v514 = vpop.f32.mrb[0].mxu0
  %v515 = vadd.f32 %v93, %v514
  %v516 = vpop.f32.mrb[0].mxu0
  %517 = vmatprep.mubr.f32.mxu0 0.0
  %518 = vmatmul.mubr.f32.gmra.mrb[0].mxu0 %v196
  %v519 = vpop.f32.mrb[0].mxu0
  %v520 = vadd.f32 %v93, %v519
  %v521 = vpop.f32.mrb[0].mxu0
  %522 = vmatprep.mubr.f32.mxu0 0.0
  %523 = vmatmul.mubr.f32.gmra.mrb[0].mxu0 %v199
  %v524 = vpop.f32.mrb[0].mxu0
  %v525 = vadd.f32 %v93, %v524
  %v526 = vpop.f32.mrb[0].mxu0
  %527 = vmatprep.mubr.f32.mxu0 0.0
  %528 = vmatmul.mubr.f32.gmra.mrb[0].mxu0 %v202
  %v529 = vpop.f32.mrb[0].mxu0
  %v530 = vadd.f32 %v93, %v529
  %v531 = vpop.f32.mrb[0].mxu0
  %532 = vmatprep.mubr.f32.mxu0 0.0
  %533 = vmatmul.mubr.f32.gmra.mrb[0].mxu0 %v205
  %v534 = vpop.f32.mrb[0].mxu0
  %v535 = vadd.f32 %v93, %v534
  %v536 = vpop.f32.mrb[0].mxu0
  %537 = vmatprep.mubr.f32.mxu0 0.0
  %538 = vmatmul.mubr.f32.gmra.mrb[0].mxu0 %v208
  %v539 = vpop.f32.mrb[0].mxu0
  %v540 = vadd.f32 %v93, %v539
  %v541 = vpop.f32.mrb[0].mxu0
  %542 = vmatprep.mubr.f32.mxu0 0.0
  %543 = vmatmul.mubr.f32.gmra.mrb[0].mxu0 %v211
  %v544 = vpop.f32.mrb[0].mxu0
  %v545 = vadd.f32 %v93, %v544
  %v546 = vpop.f32.mrb[0].mxu0
  %547 = vmatprep.mubr.f32.mxu0 0.0
  %548 = vmatmul.mubr.f32.gmra.mrb[0].mxu0 %v214
  %v549 = vpop.f32.mrb[0].mxu0
  %v550 = vadd.f32 %v93, %v549
  %v551 = vpop.f32.mrb[0].mxu0
  %552 = vmatprep.mubr.f32.mxu0 0.0
  %553 = vmatmul.mubr.f32.gmra.mrb[0].mxu0 %v217
  %v554 = vpop.f32.mrb[0].mxu0
  %v555 = vadd.f32 %v93, %v554
  %v556 = vpop.f32.mrb[0].mxu0
  %557 = vmatprep.mubr.f32.mxu0 0.0
  %558 = vmatmul.mubr.f32.gmra.mrb[0].mxu0 %v220
  %v559 = vpop.f32.mrb[0].mxu0
  %v560 = vadd.f32 %v93, %v559
  %v561 = vpop.f32.mrb[0].mxu0
  %562 = vmatprep.mubr.f32.mxu0 0.0
  %563 = vmatmul.mubr.f32.gmra.mrb[0].mxu0 %v223
  %v564 = vpop.f32.mrb[0].mxu0
  %v565 = vadd.f32 %v93, %v564
  %v566 = vpop.f32.mrb[0].mxu0
  %567 = vmatprep.mubr.f32.mxu0 0.0
  %568 = vmatmul.mubr.f32.gmra.mrb[0].mxu0 %v226
  %v569 = vpop.f32.mrb[0].mxu0
  %v570 = vadd.f32 %v93, %v569
  %v571 = vpop.f32.mrb[0].mxu0
  %572 = vmatprep.mubr.f32.mxu0 0.0
  %573 = vmatmul.mubr.f32.gmra.mrb[0].mxu0 %v229
  %v574 = vpop.f32.mrb[0].mxu0
  %v575 = vadd.f32 %v93, %v574
  %v576 = vpop.f32.mrb[0].mxu0
  %577 = vmatprep.mubr.f32.mxu0 0.0
  %578 = vmatmul.mubr.f32.gmra.mrb[0].mxu0 %v232
  %v579 = vpop.f32.mrb[0].mxu0
  %v580 = vadd.f32 %v93, %v579
  %v581 = vpop.f32.mrb[0].mxu0
  %582 = vmatprep.mubr.f32.mxu0 0.0
  %583 = vmatmul.mubr.f32.gmra.mrb[0].mxu0 %v235
  %v584 = vpop.f32.mrb[0].mxu0
  %v585 = vadd.f32 %v93, %v584
  %v586 = vpop.f32.mrb[0].mxu0
  %587 = vmatprep.mubr.f32.mxu0 0.0
  %588 = vmatmul.mubr.f32.gmra.mrb[0].mxu0 %v238
  %v589 = vpop.f32.mrb[0].mxu0
  %v590 = vadd.f32 %v93, %v589
  %v591 = vpop.f32.mrb[0].mxu0
  %592 = vmatprep.mubr.f32.mxu0 0.0
  %593 = vmatmul.mubr.f32.gmra.mrb[0].mxu0 %v241
  %v594 = vpop.f32.mrb[0].mxu0
  %v595 = vadd.f32 %v93, %v594
  %v596 = vpop.f32.mrb[0].mxu0
  %597 = vmatprep.mubr.f32.mxu0 0.0
  %598 = vmatmul.mubr.f32.gmra.mrb[0].mxu0 %v244
  %v599 = vpop.f32.mrb[0].mxu0
  %v600 = vadd.f32 %v93, %v599
  %v601 = vpop.f32.mrb[0].mxu0
  %602 = vmatprep.mubr.f32.mxu0 0.0
  %603 = vmatmul.mubr.f32.gmra.mrb[0].mxu0 %v247
  %v604 = vpop.f32.mrb[0].mxu0
  %v605 = vadd.f32 %v93, %v604
  %v606 = vpop.f32.mrb[0].mxu0
  %607 = vmatprep.mubr.f32.mxu0 0.0
  %608 = vmatmul.mubr.f32.gmra.mrb[0].mxu0 %v250
  %v609 = vpop.f32.mrb[0].mxu0
  %v610 = vadd.f32 %v93, %v609
  %v611 = vpop.f32.mrb[0].mxu0
  %612 = vmatprep.mubr.f32.mxu0 0.0
  %613 = vmatmul.mubr.f32.gmra.mrb[0].mxu0 %v253
  %v614 = vpop.f32.mrb[0].mxu0
  %v615 = vadd.f32 %v93, %v614
  %v616 = vpop.f32.mrb[0].mxu0
  %617 = vmatprep.mubr.f32.mxu0 0.0
  %618 = vmatmul.mubr.f32.gmra.mrb[0].mxu0 %v256
  %v619 = vpop.f32.mrb[0].mxu0
  %v620 = vadd.f32 %v93, %v619
  %v621 = vpop.f32.mrb[0].mxu0
  %622 = vmatprep.mubr.f32.mxu0 0.0
  %623 = vmatmul.mubr.f32.gmra.mrb[0].mxu0 %v259
  %v624 = vpop.f32.mrb[0].mxu0
  %v625 = vadd.f32 %v93, %v624
  %v626 = vpop.f32.mrb[0].mxu0
  %627 = vmatprep.mubr.f32.mxu0 0.0
  %628 = vmatmul.mubr.f32.gmra.mrb[0].mxu0 %v262
  %v629 = vpop.f32.mrb[0].mxu0
  %v630 = vadd.f32 %v93, %v629
  %v631 = vpop.f32.mrb[0].mxu0
  %632 = vmatprep.mubr.f32.mxu0 0.0
  %633 = vmatmul.mubr.f32.gmra.mrb[0].mxu0 %v265
  %v634 = vpop.f32.mrb[0].mxu0
  %v635 = vadd.f32 %v93, %v634
  %v636 = vpop.f32.mrb[0].mxu0
  %637 = vmatprep.mubr.f32.mxu0 0.0
  %638 = vmatmul.mubr.f32.gmra.mrb[0].mxu0 %v268
  %v639 = vpop.f32.mrb[0].mxu0
  %v640 = vadd.f32 %v93, %v639
  %v641 = vpop.f32.mrb[0].mxu0
  %642 = vmatprep.mubr.f32.mxu0 0.0
  %643 = vmatmul.mubr.f32.gmra.mrb[0].mxu0 %v271
  %v644 = vpop.f32.mrb[0].mxu0
  %v645 = vadd.f32 %v93, %v644
  %v646 = vpop.f32.mrb[0].mxu0
  %647 = vmatprep.mubr.f32.mxu0 0.0
  %648 = vmatmul.mubr.f32.gmra.mrb[0].mxu0 %v274
  %v649 = vpop.f32.mrb[0].mxu0
  %v650 = vadd.f32 %v93, %v649
  %v651 = vpop.f32.mrb[0].mxu0
  %652 = vmatprep.mubr.f32.mxu0 0.0
  %653 = vmatmul.mubr.f32.gmra.mrb[0].mxu0 %v277
  %v654 = vpop.f32.mrb[0].mxu0
  %v655 = vadd.f32 %v93, %v654
  %v656 = vpop.f32.mrb[0].mxu0
  %657 = vmatprep.mubr.f32.mxu0 0.0
  %658 = vmatmul.mubr.f32.gmra.mrb[0].mxu0 %v280
  %v659 = vpop.f32.mrb[0].mxu0
  %v660 = vadd.f32 %v93, %v659
  %v661 = vpop.f32.mrb[0].mxu0
  %662 = vmatprep.mubr.f32.mxu0 0.0
  %663 = vmatmul.mubr.f32.gmra.mrb[0].mxu0 %v283
  %v664 = vpop.f32.mrb[0].mxu0
  %v665 = vadd.f32 %v93, %v664
  %v666 = vpop.f32.mrb[0].mxu0
  %667 = vmatprep.mubr.f32.mxu0 0.0
  %668 = vmatmul.mubr.f32.gmra.mrb[0].mxu0 %v286
  %v669 = vpop.f32.mrb[0].mxu0
  %v670 = vadd.f32 %v93, %v669
  %v671 = vpop.f32.mrb[0].mxu0
  %672 = vdwg.mxu0
  %673 = vst [vmem:[#allocation2] sm:$0xff] %v355
  %674 = vst [vmem:[#allocation2 + $0x8] sm:$0xff] %v360
  %675 = vst [vmem:[#allocation2 + $0x10] sm:$0xff] %v365
  %676 = vst [vmem:[#allocation2 + $0x18] sm:$0xff] %v370
  %677 = vst [vmem:[#allocation2 + $0x20] sm:$0xff] %v375
  %678 = vst [vmem:[#allocation2 + $0x28] sm:$0xff] %v380
  %679 = vst [vmem:[#allocation2 + $0x30] sm:$0xff] %v385
  %680 = vst [vmem:[#allocation2 + $0x38] sm:$0xff] %v390
  %681 = vst [vmem:[#allocation2 + $0x40] sm:$0xff] %v395
  %682 = vst [vmem:[#allocation2 + $0x48] sm:$0xff] %v400
  %683 = vst [vmem:[#allocation2 + $0x50] sm:$0xff] %v405
  %684 = vst [vmem:[#allocation2 + $0x58] sm:$0xff] %v410
  %685 = vst [vmem:[#allocation2 + $0x60] sm:$0xff] %v415
  %686 = vst [vmem:[#allocation2 + $0x68] sm:$0xff] %v420
  %687 = vst [vmem:[#allocation2 + $0x70] sm:$0xff] %v425
  %688 = vst [vmem:[#allocation2 + $0x78] sm:$0xff] %v430
  %689 = vst [vmem:[#allocation2 + $0x80] sm:$0xff] %v435
  %690 = vst [vmem:[#allocation2 + $0x88] sm:$0xff] %v440
  %691 = vst [vmem:[#allocation2 + $0x90] sm:$0xff] %v445
  %692 = vst [vmem:[#allocation2 + $0x98] sm:$0xff] %v450
  %693 = vst [vmem:[#allocation2 + $0xa0] sm:$0xff] %v455
  %694 = vst [vmem:[#allocation2 + $0xa8] sm:$0xff] %v460
  %695 = vst [vmem:[#allocation2 + $0xb0] sm:$0xff] %v465
  %696 = vst [vmem:[#allocation2 + $0xb8] sm:$0xff] %v470
  %697 = vst [vmem:[#allocation2 + $0xc0] sm:$0xff] %v475
  %698 = vst [vmem:[#allocation2 + $0xc8] sm:$0xff] %v480
  %699 = vst [vmem:[#allocation2 + $0xd0] sm:$0xff] %v485
  %700 = vst [vmem:[#allocation2 + $0xd8] sm:$0xff] %v490
  %701 = vst [vmem:[#allocation2 + $0xe0] sm:$0xff] %v495
  %702 = vst [vmem:[#allocation2 + $0xe8] sm:$0xff] %v500
  %703 = vst [vmem:[#allocation2 + $0xf0] sm:$0xff] %v505
  %704 = vst [vmem:[#allocation2 + $0xf8] sm:$0xff] %v510
  %705 = vst [vmem:[#allocation2 + $0x100] sm:$0xff] %v515
  %706 = vst [vmem:[#allocation2 + $0x108] sm:$0xff] %v520
  %707 = vst [vmem:[#allocation2 + $0x110] sm:$0xff] %v525
  %708 = vst [vmem:[#allocation2 + $0x118] sm:$0xff] %v530
  %709 = vst [vmem:[#allocation2 + $0x120] sm:$0xff] %v535
  %710 = vst [vmem:[#allocation2 + $0x128] sm:$0xff] %v540
  %711 = vst [vmem:[#allocation2 + $0x130] sm:$0xff] %v545
  %712 = vst [vmem:[#allocation2 + $0x138] sm:$0xff] %v550
  %713 = vst [vmem:[#allocation2 + $0x140] sm:$0xff] %v555
  %714 = vst [vmem:[#allocation2 + $0x148] sm:$0xff] %v560
  %715 = vst [vmem:[#allocation2 + $0x150] sm:$0xff] %v565
  %716 = vst [vmem:[#allocation2 + $0x158] sm:$0xff] %v570
  %717 = vst [vmem:[#allocation2 + $0x160] sm:$0xff] %v575
  %718 = vst [vmem:[#allocation2 + $0x168] sm:$0xff] %v580
  %719 = vst [vmem:[#allocation2 + $0x170] sm:$0xff] %v585
  %720 = vst [vmem:[#allocation2 + $0x178] sm:$0xff] %v590
  %721 = vst [vmem:[#allocation2 + $0x180] sm:$0xff] %v595
  %722 = vst [vmem:[#allocation2 + $0x188] sm:$0xff] %v600
  %723 = vst [vmem:[#allocation2 + $0x190] sm:$0xff] %v605
  %724 = vst [vmem:[#allocation2 + $0x198] sm:$0xff] %v610
  %725 = vst [vmem:[#allocation2 + $0x1a0] sm:$0xff] %v615
  %726 = vst [vmem:[#allocation2 + $0x1a8] sm:$0xff] %v620
  %727 = vst [vmem:[#allocation2 + $0x1b0] sm:$0xff] %v625
  %728 = vst [vmem:[#allocation2 + $0x1b8] sm:$0xff] %v630
  %729 = vst [vmem:[#allocation2 + $0x1c0] sm:$0xff] %v635
  %730 = vst [vmem:[#allocation2 + $0x1c8] sm:$0xff] %v640
  %731 = vst [vmem:[#allocation2 + $0x1d0] sm:$0xff] %v645
  %732 = vst [vmem:[#allocation2 + $0x1d8] sm:$0xff] %v650
  %733 = vst [vmem:[#allocation2 + $0x1e0] sm:$0xff] %v655
  %734 = vst [vmem:[#allocation2 + $0x1e8] sm:$0xff] %v660
  %735 = vst [vmem:[#allocation2 + $0x1f0] sm:$0xff] %v665
  %736 = vst [vmem:[#allocation2 + $0x1f8] sm:$0xff] %v670
  %v737 = vld [vmem:[%s5] sm:$0x1]
  %v738 = vtanh.pop %v355
  %v739 = vtanh.pop %v360
  %v740 = vtanh.pop %v365
  %v741 = vtanh.pop %v370
  %v742 = vtanh.pop %v375
  %v743 = vtanh.pop %v380
  %v744 = vtanh.pop %v385
  %v745 = vtanh.pop %v390
  %v746 = vtanh.pop %v395
  %v747 = vtanh.pop %v400
  %v748 = vtanh.pop %v405
  %v749 = vtanh.pop %v410
  %v750 = vtanh.pop %v415
  %v751 = vtanh.pop %v420
  %v752 = vtanh.pop %v425
  %v753 = vtanh.pop %v430
  %v754 = vtanh.pop %v435
  %v755 = vtanh.pop %v440
  %v756 = vtanh.pop %v445
  %v757 = vtanh.pop %v450
  %v758 = vtanh.pop %v455
  %v759 = vtanh.pop %v460
  %v760 = vtanh.pop %v465
  %v761 = vtanh.pop %v470
  %v762 = vtanh.pop %v475
  %v763 = vtanh.pop %v480
  %v764 = vtanh.pop %v485
  %v765 = vtanh.pop %v490
  %v766 = vtanh.pop %v495
  %v767 = vtanh.pop %v500
  %v768 = vtanh.pop %v505
  %v769 = vtanh.pop %v510
  %v770 = vtanh.pop %v515
  %v771 = vtanh.pop %v520
  %v772 = vtanh.pop %v525
  %v773 = vtanh.pop %v530
  %v774 = vtanh.pop %v535
  %v775 = vtanh.pop %v540
  %v776 = vtanh.pop %v545
  %v777 = vtanh.pop %v550
  %v778 = vtanh.pop %v555
  %v779 = vtanh.pop %v560
  %v780 = vtanh.pop %v565
  %v781 = vtanh.pop %v570
  %v782 = vtanh.pop %v575
  %v783 = vtanh.pop %v580
  %v784 = vtanh.pop %v585
  %v785 = vtanh.pop %v590
  %v786 = vtanh.pop %v595
  %v787 = vtanh.pop %v600
  %v788 = vtanh.pop %v605
  %v789 = vtanh.pop %v610
  %v790 = vtanh.pop %v615
  %v791 = vtanh.pop %v620
  %v792 = vtanh.pop %v625
  %v793 = vtanh.pop %v630
  %v794 = vtanh.pop %v635
  %v795 = vtanh.pop %v640
  %v796 = vtanh.pop %v645
  %v797 = vtanh.pop %v650
  %v798 = vtanh.pop %v655
  %v799 = vtanh.pop %v660
  %v800 = vtanh.pop %v665
  %v801 = vtanh.pop %v670
  %v802 = vadd.f32 %v738, 1.0
  %v803 = vadd.f32 %v739, 1.0
  %v804 = vadd.f32 %v740, 1.0
  %v805 = vadd.f32 %v741, 1.0
  %v806 = vadd.f32 %v742, 1.0
  %v807 = vadd.f32 %v743, 1.0
  %v808 = vadd.f32 %v744, 1.0
  %v809 = vadd.f32 %v745, 1.0
  %v810 = vadd.f32 %v746, 1.0
  %v811 = vadd.f32 %v747, 1.0
  %v812 = vadd.f32 %v748, 1.0
  %v813 = vadd.f32 %v749, 1.0
  %v814 = vadd.f32 %v750, 1.0
  %v815 = vadd.f32 %v751, 1.0
  %v816 = vadd.f32 %v752, 1.0
  %v817 = vadd.f32 %v753, 1.0
  %v818 = vadd.f32 %v754, 1.0
  %v819 = vadd.f32 %v755, 1.0
  %v820 = vadd.f32 %v756, 1.0
  %v821 = vadd.f32 %v757, 1.0
  %v822 = vadd.f32 %v758, 1.0
  %v823 = vadd.f32 %v759, 1.0
  %v824 = vadd.f32 %v760, 1.0
  %v825 = vadd.f32 %v761, 1.0
  %v826 = vadd.f32 %v762, 1.0
  %v827 = vadd.f32 %v763, 1.0
  %v828 = vadd.f32 %v764, 1.0
  %v829 = vadd.f32 %v765, 1.0
  %v830 = vadd.f32 %v766, 1.0
  %v831 = vadd.f32 %v767, 1.0
  %v832 = vadd.f32 %v768, 1.0
  %v833 = vadd.f32 %v769, 1.0
  %v834 = vadd.f32 %v770, 1.0
  %v835 = vadd.f32 %v771, 1.0
  %v836 = vadd.f32 %v772, 1.0
  %v837 = vadd.f32 %v773, 1.0
  %v838 = vadd.f32 %v774, 1.0
  %v839 = vadd.f32 %v775, 1.0
  %v840 = vadd.f32 %v776, 1.0
  %v841 = vadd.f32 %v777, 1.0
  %v842 = vadd.f32 %v778, 1.0
  %v843 = vadd.f32 %v779, 1.0
  %v844 = vadd.f32 %v780, 1.0
  %v845 = vadd.f32 %v781, 1.0
  %v846 = vadd.f32 %v782, 1.0
  %v847 = vadd.f32 %v783, 1.0
  %v848 = vadd.f32 %v784, 1.0
  %v849 = vadd.f32 %v785, 1.0
  %v850 = vadd.f32 %v786, 1.0
  %v851 = vadd.f32 %v787, 1.0
  %v852 = vadd.f32 %v788, 1.0
  %v853 = vadd.f32 %v789, 1.0
  %v854 = vadd.f32 %v790, 1.0
  %v855 = vadd.f32 %v791, 1.0
  %v856 = vadd.f32 %v792, 1.0
  %v857 = vadd.f32 %v793, 1.0
  %v858 = vadd.f32 %v794, 1.0
  %v859 = vadd.f32 %v795, 1.0
  %v860 = vadd.f32 %v796, 1.0
  %v861 = vadd.f32 %v797, 1.0
  %v862 = vadd.f32 %v798, 1.0
  %v863 = vadd.f32 %v799, 1.0
  %v864 = vadd.f32 %v800, 1.0
  %v865 = vadd.f32 %v801, 1.0
  %v866 = vlaneseq
  %v867 = vshrl.u32 %v866, 7
  %v868 = vsub.s32 0, %v867
  %v869 = vrot.slane %v737, %v868
  %v870 = vmul.f32 %v869, %v802
  %v871 = vmul.f32 %v869, %v803
  %v872 = vmul.f32 %v869, %v804
  %v873 = vmul.f32 %v869, %v805
  %v874 = vmul.f32 %v869, %v806
  %v875 = vmul.f32 %v869, %v807
  %v876 = vmul.f32 %v869, %v808
  %v877 = vmul.f32 %v869, %v809
  %v878 = vmul.f32 %v869, %v810
  %v879 = vmul.f32 %v869, %v811
  %v880 = vmul.f32 %v869, %v812
  %v881 = vmul.f32 %v869, %v813
  %v882 = vmul.f32 %v869, %v814
  %v883 = vmul.f32 %v869, %v815
  %v884 = vmul.f32 %v869, %v816
  %v885 = vmul.f32 %v869, %v817
  %v886 = vmul.f32 %v869, %v818
  %v887 = vmul.f32 %v869, %v819
  %v888 = vmul.f32 %v869, %v820
  %v889 = vmul.f32 %v869, %v821
  %v890 = vmul.f32 %v869, %v822
  %v891 = vmul.f32 %v869, %v823
  %v892 = vmul.f32 %v869, %v824
  %v893 = vmul.f32 %v869, %v825
  %v894 = vmul.f32 %v869, %v826
  %v895 = vmul.f32 %v869, %v827
  %v896 = vmul.f32 %v869, %v828
  %v897 = vmul.f32 %v869, %v829
  %v898 = vmul.f32 %v869, %v830
  %v899 = vmul.f32 %v869, %v831
  %v900 = vmul.f32 %v869, %v832
  %v901 = vmul.f32 %v869, %v833
  %v902 = vmul.f32 %v869, %v834
  %v903 = vmul.f32 %v869, %v835
  %v904 = vmul.f32 %v869, %v836
  %v905 = vmul.f32 %v869, %v837
  %v906 = vmul.f32 %v869, %v838
  %v907 = vmul.f32 %v869, %v839
  %v908 = vmul.f32 %v869, %v840
  %v909 = vmul.f32 %v869, %v841
  %v910 = vmul.f32 %v869, %v842
  %v911 = vmul.f32 %v869, %v843
  %v912 = vmul.f32 %v869, %v844
  %v913 = vmul.f32 %v869, %v845
  %v914 = vmul.f32 %v869, %v846
  %v915 = vmul.f32 %v869, %v847
  %v916 = vmul.f32 %v869, %v848
  %v917 = vmul.f32 %v869, %v849
  %v918 = vmul.f32 %v869, %v850
  %v919 = vmul.f32 %v869, %v851
  %v920 = vmul.f32 %v869, %v852
  %v921 = vmul.f32 %v869, %v853
  %v922 = vmul.f32 %v869, %v854
  %v923 = vmul.f32 %v869, %v855
  %v924 = vmul.f32 %v869, %v856
  %v925 = vmul.f32 %v869, %v857
  %v926 = vmul.f32 %v869, %v858
  %v927 = vmul.f32 %v869, %v859
  %v928 = vmul.f32 %v869, %v860
  %v929 = vmul.f32 %v869, %v861
  %v930 = vmul.f32 %v869, %v862
  %v931 = vmul.f32 %v869, %v863
  %v932 = vmul.f32 %v869, %v864
  %v933 = vmul.f32 %v869, %v865
  %934 = vst [vmem:[#allocation3] sm:$0xff] %v870
  %935 = vst [vmem:[#allocation3 + $0x8] sm:$0xff] %v871
  %936 = vst [vmem:[#allocation3 + $0x10] sm:$0xff] %v872
  %937 = vst [vmem:[#allocation3 + $0x18] sm:$0xff] %v873
  %938 = vst [vmem:[#allocation3 + $0x20] sm:$0xff] %v874
  %939 = vst [vmem:[#allocation3 + $0x28] sm:$0xff] %v875
  %940 = vst [vmem:[#allocation3 + $0x30] sm:$0xff] %v876
  %941 = vst [vmem:[#allocation3 + $0x38] sm:$0xff] %v877
  %942 = vst [vmem:[#allocation3 + $0x40] sm:$0xff] %v878
  %943 = vst [vmem:[#allocation3 + $0x48] sm:$0xff] %v879
  %944 = vst [vmem:[#allocation3 + $0x50] sm:$0xff] %v880
  %945 = vst [vmem:[#allocation3 + $0x58] sm:$0xff] %v881
  %946 = vst [vmem:[#allocation3 + $0x60] sm:$0xff] %v882
  %947 = vst [vmem:[#allocation3 + $0x68] sm:$0xff] %v883
  %948 = vst [vmem:[#allocation3 + $0x70] sm:$0xff] %v884
  %949 = vst [vmem:[#allocation3 + $0x78] sm:$0xff] %v885
  %950 = vst [vmem:[#allocation3 + $0x80] sm:$0xff] %v886
  %951 = vst [vmem:[#allocation3 + $0x88] sm:$0xff] %v887
  %952 = vst [vmem:[#allocation3 + $0x90] sm:$0xff] %v888
  %953 = vst [vmem:[#allocation3 + $0x98] sm:$0xff] %v889
  %954 = vst [vmem:[#allocation3 + $0xa0] sm:$0xff] %v890
  %955 = vst [vmem:[#allocation3 + $0xa8] sm:$0xff] %v891
  %956 = vst [vmem:[#allocation3 + $0xb0] sm:$0xff] %v892
  %957 = vst [vmem:[#allocation3 + $0xb8] sm:$0xff] %v893
  %958 = vst [vmem:[#allocation3 + $0xc0] sm:$0xff] %v894
  %959 = vst [vmem:[#allocation3 + $0xc8] sm:$0xff] %v895
  %960 = vst [vmem:[#allocation3 + $0xd0] sm:$0xff] %v896
  %961 = vst [vmem:[#allocation3 + $0xd8] sm:$0xff] %v897
  %962 = vst [vmem:[#allocation3 + $0xe0] sm:$0xff] %v898
  %963 = vst [vmem:[#allocation3 + $0xe8] sm:$0xff] %v899
  %964 = vst [vmem:[#allocation3 + $0xf0] sm:$0xff] %v900
  %965 = vst [vmem:[#allocation3 + $0xf8] sm:$0xff] %v901
  %966 = vst [vmem:[#allocation3 + $0x100] sm:$0xff] %v902
  %967 = vst [vmem:[#allocation3 + $0x108] sm:$0xff] %v903
  %968 = vst [vmem:[#allocation3 + $0x110] sm:$0xff] %v904
  %969 = vst [vmem:[#allocation3 + $0x118] sm:$0xff] %v905
  %970 = vst [vmem:[#allocation3 + $0x120] sm:$0xff] %v906
  %971 = vst [vmem:[#allocation3 + $0x128] sm:$0xff] %v907
  %972 = vst [vmem:[#allocation3 + $0x130] sm:$0xff] %v908
  %973 = vst [vmem:[#allocation3 + $0x138] sm:$0xff] %v909
  %974 = vst [vmem:[#allocation3 + $0x140] sm:$0xff] %v910
  %975 = vst [vmem:[#allocation3 + $0x148] sm:$0xff] %v911
  %976 = vst [vmem:[#allocation3 + $0x150] sm:$0xff] %v912
  %977 = vst [vmem:[#allocation3 + $0x158] sm:$0xff] %v913
  %978 = vst [vmem:[#allocation3 + $0x160] sm:$0xff] %v914
  %979 = vst [vmem:[#allocation3 + $0x168] sm:$0xff] %v915
  %980 = vst [vmem:[#allocation3 + $0x170] sm:$0xff] %v916
  %981 = vst [vmem:[#allocation3 + $0x178] sm:$0xff] %v917
  %982 = vst [vmem:[#allocation3 + $0x180] sm:$0xff] %v918
  %983 = vst [vmem:[#allocation3 + $0x188] sm:$0xff] %v919
  %984 = vst [vmem:[#allocation3 + $0x190] sm:$0xff] %v920
  %985 = vst [vmem:[#allocation3 + $0x198] sm:$0xff] %v921
  %986 = vst [vmem:[#allocation3 + $0x1a0] sm:$0xff] %v922
  %987 = vst [vmem:[#allocation3 + $0x1a8] sm:$0xff] %v923
  %988 = vst [vmem:[#allocation3 + $0x1b0] sm:$0xff] %v924
  %989 = vst [vmem:[#allocation3 + $0x1b8] sm:$0xff] %v925
  %990 = vst [vmem:[#allocation3 + $0x1c0] sm:$0xff] %v926
  %991 = vst [vmem:[#allocation3 + $0x1c8] sm:$0xff] %v927
  %992 = vst [vmem:[#allocation3 + $0x1d0] sm:$0xff] %v928
  %993 = vst [vmem:[#allocation3 + $0x1d8] sm:$0xff] %v929
  %994 = vst [vmem:[#allocation3 + $0x1e0] sm:$0xff] %v930
  %995 = vst [vmem:[#allocation3 + $0x1e8] sm:$0xff] %v931
  %996 = vst [vmem:[#allocation3 + $0x1f0] sm:$0xff] %v932
  %997 = vst [vmem:[#allocation3 + $0x1f8] sm:$0xff] %v933
  %v998 = vld [vmem:[#allocation2] sm:$0xff]
  %v999 = vld [vmem:[#allocation2 + $0x8] sm:$0xff]
  %v1000 = vld [vmem:[#allocation2 + $0x10] sm:$0xff]
  %v1001 = vld [vmem:[#allocation2 + $0x18] sm:$0xff]
  %v1002 = vld [vmem:[#allocation2 + $0x20] sm:$0xff]
  %v1003 = vld [vmem:[#allocation2 + $0x28] sm:$0xff]
  %v1004 = vld [vmem:[#allocation2 + $0x30] sm:$0xff]
  %v1005 = vld [vmem:[#allocation2 + $0x38] sm:$0xff]
  %v1006 = vld [vmem:[#allocation2 + $0x40] sm:$0xff]
  %v1007 = vld [vmem:[#allocation2 + $0x48] sm:$0xff]
  %v1008 = vld [vmem:[#allocation2 + $0x50] sm:$0xff]
  %v1009 = vld [vmem:[#allocation2 + $0x58] sm:$0xff]
  %v1010 = vld [vmem:[#allocation2 + $0x60] sm:$0xff]
  %v1011 = vld [vmem:[#allocation2 + $0x68] sm:$0xff]
  %v1012 = vld [vmem:[#allocation2 + $0x70] sm:$0xff]
  %v1013 = vld [vmem:[#allocation2 + $0x78] sm:$0xff]
  %v1014 = vld [vmem:[#allocation2 + $0x80] sm:$0xff]
  %v1015 = vld [vmem:[#allocation2 + $0x88] sm:$0xff]
  %v1016 = vld [vmem:[#allocation2 + $0x90] sm:$0xff]
  %v1017 = vld [vmem:[#allocation2 + $0x98] sm:$0xff]
  %v1018 = vld [vmem:[#allocation2 + $0xa0] sm:$0xff]
  %v1019 = vld [vmem:[#allocation2 + $0xa8] sm:$0xff]
  %v1020 = vld [vmem:[#allocation2 + $0xb0] sm:$0xff]
  %v1021 = vld [vmem:[#allocation2 + $0xb8] sm:$0xff]
  %v1022 = vld [vmem:[#allocation2 + $0xc0] sm:$0xff]
  %v1023 = vld [vmem:[#allocation2 + $0xc8] sm:$0xff]
  %v1024 = vld [vmem:[#allocation2 + $0xd0] sm:$0xff]
  %v1025 = vld [vmem:[#allocation2 + $0xd8] sm:$0xff]
  %v1026 = vld [vmem:[#allocation2 + $0xe0] sm:$0xff]
  %v1027 = vld [vmem:[#allocation2 + $0xe8] sm:$0xff]
  %v1028 = vld [vmem:[#allocation2 + $0xf0] sm:$0xff]
  %v1029 = vld [vmem:[#allocation2 + $0xf8] sm:$0xff]
  %v1030 = vld [vmem:[#allocation2 + $0x100] sm:$0xff]
  %v1031 = vld [vmem:[#allocation2 + $0x108] sm:$0xff]
  %v1032 = vld [vmem:[#allocation2 + $0x110] sm:$0xff]
  %v1033 = vld [vmem:[#allocation2 + $0x118] sm:$0xff]
  %v1034 = vld [vmem:[#allocation2 + $0x120] sm:$0xff]
  %v1035 = vld [vmem:[#allocation2 + $0x128] sm:$0xff]
  %v1036 = vld [vmem:[#allocation2 + $0x130] sm:$0xff]
  %v1037 = vld [vmem:[#allocation2 + $0x138] sm:$0xff]
  %v1038 = vld [vmem:[#allocation2 + $0x140] sm:$0xff]
  %v1039 = vld [vmem:[#allocation2 + $0x148] sm:$0xff]
  %v1040 = vld [vmem:[#allocation2 + $0x150] sm:$0xff]
  %v1041 = vld [vmem:[#allocation2 + $0x158] sm:$0xff]
  %v1042 = vld [vmem:[#allocation2 + $0x160] sm:$0xff]
  %v1043 = vld [vmem:[#allocation2 + $0x168] sm:$0xff]
  %v1044 = vld [vmem:[#allocation2 + $0x170] sm:$0xff]
  %v1045 = vld [vmem:[#allocation2 + $0x178] sm:$0xff]
  %v1046 = vld [vmem:[#allocation2 + $0x180] sm:$0xff]
  %v1047 = vld [vmem:[#allocation2 + $0x188] sm:$0xff]
  %v1048 = vld [vmem:[#allocation2 + $0x190] sm:$0xff]
  %v1049 = vld [vmem:[#allocation2 + $0x198] sm:$0xff]
  %v1050 = vld [vmem:[#allocation2 + $0x1a0] sm:$0xff]
  %v1051 = vld [vmem:[#allocation2 + $0x1a8] sm:$0xff]
  %v1052 = vld [vmem:[#allocation2 + $0x1b0] sm:$0xff]
  %v1053 = vld [vmem:[#allocation2 + $0x1b8] sm:$0xff]
  %v1054 = vld [vmem:[#allocation2 + $0x1c0] sm:$0xff]
  %v1055 = vld [vmem:[#allocation2 + $0x1c8] sm:$0xff]
  %v1056 = vld [vmem:[#allocation2 + $0x1d0] sm:$0xff]
  %v1057 = vld [vmem:[#allocation2 + $0x1d8] sm:$0xff]
  %v1058 = vld [vmem:[#allocation2 + $0x1e0] sm:$0xff]
  %v1059 = vld [vmem:[#allocation2 + $0x1e8] sm:$0xff]
  %v1060 = vld [vmem:[#allocation2 + $0x1f0] sm:$0xff]
  %v1061 = vld [vmem:[#allocation2 + $0x1f8] sm:$0xff]
  %v1062 = vld [vmem:[#allocation3] sm:$0xff]
  %v1063 = vld [vmem:[#allocation3 + $0x8] sm:$0xff]
  %v1064 = vld [vmem:[#allocation3 + $0x10] sm:$0xff]
  %v1065 = vld [vmem:[#allocation3 + $0x18] sm:$0xff]
  %v1066 = vld [vmem:[#allocation3 + $0x20] sm:$0xff]
  %v1067 = vld [vmem:[#allocation3 + $0x28] sm:$0xff]
  %v1068 = vld [vmem:[#allocation3 + $0x30] sm:$0xff]
  %v1069 = vld [vmem:[#allocation3 + $0x38] sm:$0xff]
  %v1070 = vld [vmem:[#allocation3 + $0x40] sm:$0xff]
  %v1071 = vld [vmem:[#allocation3 + $0x48] sm:$0xff]
  %v1072 = vld [vmem:[#allocation3 + $0x50] sm:$0xff]
  %v1073 = vld [vmem:[#allocation3 + $0x58] sm:$0xff]
  %v1074 = vld [vmem:[#allocation3 + $0x60] sm:$0xff]
  %v1075 = vld [vmem:[#allocation3 + $0x68] sm:$0xff]
  %v1076 = vld [vmem:[#allocation3 + $0x70] sm:$0xff]
  %v1077 = vld [vmem:[#allocation3 + $0x78] sm:$0xff]
  %v1078 = vld [vmem:[#allocation3 + $0x80] sm:$0xff]
  %v1079 = vld [vmem:[#allocation3 + $0x88] sm:$0xff]
  %v1080 = vld [vmem:[#allocation3 + $0x90] sm:$0xff]
  %v1081 = vld [vmem:[#allocation3 + $0x98] sm:$0xff]
  %v1082 = vld [vmem:[#allocation3 + $0xa0] sm:$0xff]
  %v1083 = vld [vmem:[#allocation3 + $0xa8] sm:$0xff]
  %v1084 = vld [vmem:[#allocation3 + $0xb0] sm:$0xff]
  %v1085 = vld [vmem:[#allocation3 + $0xb8] sm:$0xff]
  %v1086 = vld [vmem:[#allocation3 + $0xc0] sm:$0xff]
  %v1087 = vld [vmem:[#allocation3 + $0xc8] sm:$0xff]
  %v1088 = vld [vmem:[#allocation3 + $0xd0] sm:$0xff]
  %v1089 = vld [vmem:[#allocation3 + $0xd8] sm:$0xff]
  %v1090 = vld [vmem:[#allocation3 + $0xe0] sm:$0xff]
  %v1091 = vld [vmem:[#allocation3 + $0xe8] sm:$0xff]
  %v1092 = vld [vmem:[#allocation3 + $0xf0] sm:$0xff]
  %v1093 = vld [vmem:[#allocation3 + $0xf8] sm:$0xff]
  %v1094 = vld [vmem:[#allocation3 + $0x100] sm:$0xff]
  %v1095 = vld [vmem:[#allocation3 + $0x108] sm:$0xff]
  %v1096 = vld [vmem:[#allocation3 + $0x110] sm:$0xff]
  %v1097 = vld [vmem:[#allocation3 + $0x118] sm:$0xff]
  %v1098 = vld [vmem:[#allocation3 + $0x120] sm:$0xff]
  %v1099 = vld [vmem:[#allocation3 + $0x128] sm:$0xff]
  %v1100 = vld [vmem:[#allocation3 + $0x130] sm:$0xff]
  %v1101 = vld [vmem:[#allocation3 + $0x138] sm:$0xff]
  %v1102 = vld [vmem:[#allocation3 + $0x140] sm:$0xff]
  %v1103 = vld [vmem:[#allocation3 + $0x148] sm:$0xff]
  %v1104 = vld [vmem:[#allocation3 + $0x150] sm:$0xff]
  %v1105 = vld [vmem:[#allocation3 + $0x158] sm:$0xff]
  %v1106 = vld [vmem:[#allocation3 + $0x160] sm:$0xff]
  %v1107 = vld [vmem:[#allocation3 + $0x168] sm:$0xff]
  %v1108 = vld [vmem:[#allocation3 + $0x170] sm:$0xff]
  %v1109 = vld [vmem:[#allocation3 + $0x178] sm:$0xff]
  %v1110 = vld [vmem:[#allocation3 + $0x180] sm:$0xff]
  %v1111 = vld [vmem:[#allocation3 + $0x188] sm:$0xff]
  %v1112 = vld [vmem:[#allocation3 + $0x190] sm:$0xff]
  %v1113 = vld [vmem:[#allocation3 + $0x198] sm:$0xff]
  %v1114 = vld [vmem:[#allocation3 + $0x1a0] sm:$0xff]
  %v1115 = vld [vmem:[#allocation3 + $0x1a8] sm:$0xff]
  %v1116 = vld [vmem:[#allocation3 + $0x1b0] sm:$0xff]
  %v1117 = vld [vmem:[#allocation3 + $0x1b8] sm:$0xff]
  %v1118 = vld [vmem:[#allocation3 + $0x1c0] sm:$0xff]
  %v1119 = vld [vmem:[#allocation3 + $0x1c8] sm:$0xff]
  %v1120 = vld [vmem:[#allocation3 + $0x1d0] sm:$0xff]
  %v1121 = vld [vmem:[#allocation3 + $0x1d8] sm:$0xff]
  %v1122 = vld [vmem:[#allocation3 + $0x1e0] sm:$0xff]
  %v1123 = vld [vmem:[#allocation3 + $0x1e8] sm:$0xff]
  %v1124 = vld [vmem:[#allocation3 + $0x1f0] sm:$0xff]
  %v1125 = vld [vmem:[#allocation3 + $0x1f8] sm:$0xff]
  %v1126 = vld [vmem:[%s3] sm:$0xff]
  %v1127 = vld [vmem:[%s3 + $0x8] sm:$0xff]
  %v1128 = vld [vmem:[%s3 + $0x10] sm:$0xff]
  %v1129 = vld [vmem:[%s3 + $0x18] sm:$0xff]
  %v1130 = vld [vmem:[%s3 + $0x20] sm:$0xff]
  %v1131 = vld [vmem:[%s3 + $0x28] sm:$0xff]
  %v1132 = vld [vmem:[%s3 + $0x30] sm:$0xff]
  %v1133 = vld [vmem:[%s3 + $0x38] sm:$0xff]
  %v1134 = vld [vmem:[%s3 + $0x40] sm:$0xff]
  %v1135 = vld [vmem:[%s3 + $0x48] sm:$0xff]
  %v1136 = vld [vmem:[%s3 + $0x50] sm:$0xff]
  %v1137 = vld [vmem:[%s3 + $0x58] sm:$0xff]
  %v1138 = vld [vmem:[%s3 + $0x60] sm:$0xff]
  %v1139 = vld [vmem:[%s3 + $0x68] sm:$0xff]
  %v1140 = vld [vmem:[%s3 + $0x70] sm:$0xff]
  %v1141 = vld [vmem:[%s3 + $0x78] sm:$0xff]
  %1142 = vmatprep.subr.mxu0 0.0
  %1143 = vmatpush1.msra.mxu0 %v1126
  %1144 = vmatprep.subr.mxu0 0.0
  %1145 = vmatpush1.msra.mxu0 %v1127
  %1146 = vmatprep.subr.mxu0 0.0
  %1147 = vmatpush1.msra.mxu0 %v1128
  %1148 = vmatprep.subr.mxu0 0.0
  %1149 = vmatpush1.msra.mxu0 %v1129
  %1150 = vmatprep.subr.mxu0 0.0
  %1151 = vmatpush1.msra.mxu0 %v1130
  %1152 = vmatprep.subr.mxu0 0.0
  %1153 = vmatpush1.msra.mxu0 %v1131
  %1154 = vmatprep.subr.mxu0 0.0
  %1155 = vmatpush1.msra.mxu0 %v1132
  %1156 = vmatprep.subr.mxu0 0.0
  %1157 = vmatpush1.msra.mxu0 %v1133
  %1158 = vmatprep.subr.mxu0 0.0
  %1159 = vmatpush1.msra.mxu0 %v1134
  %1160 = vmatprep.subr.mxu0 0.0
  %1161 = vmatpush1.msra.mxu0 %v1135
  %1162 = vmatprep.subr.mxu0 0.0
  %1163 = vmatpush1.msra.mxu0 %v1136
  %1164 = vmatprep.subr.mxu0 0.0
  %1165 = vmatpush1.msra.mxu0 %v1137
  %1166 = vmatprep.subr.mxu0 0.0
  %1167 = vmatpush1.msra.mxu0 %v1138
  %1168 = vmatprep.subr.mxu0 0.0
  %1169 = vmatpush1.msra.mxu0 %v1139
  %1170 = vmatprep.subr.mxu0 0.0
  %1171 = vmatpush1.msra.mxu0 %v1140
  %1172 = vmatprep.subr.mxu0 0.0
  %1173 = vmatpush1.msra.mxu0 %v1141
  %1174 = vmatprep.subr.mxu0 0.0
  %1175 = vmatpush1.msra.mxu0 0.0
  %1176 = vmatprep.subr.mxu0 0.0
  %1177 = vmatpush1.msra.mxu0 0.0
  %1178 = vmatprep.subr.mxu0 0.0
  %1179 = vmatpush1.msra.mxu0 0.0
  %1180 = vmatprep.subr.mxu0 0.0
  %1181 = vmatpush1.msra.mxu0 0.0
  %1182 = vmatprep.subr.mxu0 0.0
  %1183 = vmatpush1.msra.mxu0 0.0
  %1184 = vmatprep.subr.mxu0 0.0
  %1185 = vmatpush1.msra.mxu0 0.0
  %1186 = vmatprep.subr.mxu0 0.0
  %1187 = vmatpush1.msra.mxu0 0.0
  %1188 = vmatprep.subr.mxu0 0.0
  %1189 = vmatpush1.msra.mxu0 0.0
  %1190 = vmatprep.subr.mxu0 0.0
  %1191 = vmatpush1.msra.mxu0 0.0
  %1192 = vmatprep.subr.mxu0 0.0
  %1193 = vmatpush1.msra.mxu0 0.0
  %1194 = vmatprep.subr.mxu0 0.0
  %1195 = vmatpush1.msra.mxu0 0.0
  %1196 = vmatprep.subr.mxu0 0.0
  %1197 = vmatpush1.msra.mxu0 0.0
  %1198 = vmatprep.subr.mxu0 0.0
  %1199 = vmatpush1.msra.mxu0 0.0
  %1200 = vmatprep.subr.mxu0 0.0
  %1201 = vmatpush1.msra.mxu0 0.0
  %1202 = vmatprep.subr.mxu0 0.0
  %1203 = vmatpush1.msra.mxu0 0.0
  %1204 = vmatprep.subr.mxu0 0.0
  %1205 = vmatpush1.msra.mxu0 0.0
  %1206 = vmatprep.mubr.f32.mxu0 0.0
  %1207 = vmatmul.mubr.f32.gmra.mrb[0].mxu0 %v1062
  %v1208 = vpop.f32.mrb[0].mxu0
  %v1209 = vadd.f32 0.0, %v1208
  %v1210 = vpop.f32.mrb[0].mxu0
  %1211 = vmatprep.mubr.f32.mxu0 0.0
  %1212 = vmatmul.mubr.f32.gmra.mrb[0].mxu0 %v1063
  %v1213 = vpop.f32.mrb[0].mxu0
  %v1214 = vadd.f32 0.0, %v1213
  %v1215 = vpop.f32.mrb[0].mxu0
  %1216 = vmatprep.mubr.f32.mxu0 0.0
  %1217 = vmatmul.mubr.f32.gmra.mrb[0].mxu0 %v1064
  %v1218 = vpop.f32.mrb[0].mxu0
  %v1219 = vadd.f32 0.0, %v1218
  %v1220 = vpop.f32.mrb[0].mxu0
  %1221 = vmatprep.mubr.f32.mxu0 0.0
  %1222 = vmatmul.mubr.f32.gmra.mrb[0].mxu0 %v1065
  %v1223 = vpop.f32.mrb[0].mxu0
  %v1224 = vadd.f32 0.0, %v1223
  %v1225 = vpop.f32.mrb[0].mxu0
  %1226 = vmatprep.mubr.f32.mxu0 0.0
  %1227 = vmatmul.mubr.f32.gmra.mrb[0].mxu0 %v1066
  %v1228 = vpop.f32.mrb[0].mxu0
  %v1229 = vadd.f32 0.0, %v1228
  %v1230 = vpop.f32.mrb[0].mxu0
  %1231 = vmatprep.mubr.f32.mxu0 0.0
  %1232 = vmatmul.mubr.f32.gmra.mrb[0].mxu0 %v1067
  %v1233 = vpop.f32.mrb[0].mxu0
  %v1234 = vadd.f32 0.0, %v1233
  %v1235 = vpop.f32.mrb[0].mxu0
  %1236 = vmatprep.mubr.f32.mxu0 0.0
  %1237 = vmatmul.mubr.f32.gmra.mrb[0].mxu0 %v1068
  %v1238 = vpop.f32.mrb[0].mxu0
  %v1239 = vadd.f32 0.0, %v1238
  %v1240 = vpop.f32.mrb[0].mxu0
  %1241 = vmatprep.mubr.f32.mxu0 0.0
  %1242 = vmatmul.mubr.f32.gmra.mrb[0].mxu0 %v1069
  %v1243 = vpop.f32.mrb[0].mxu0
  %v1244 = vadd.f32 0.0, %v1243
  %v1245 = vpop.f32.mrb[0].mxu0
  %1246 = vmatprep.mubr.f32.mxu0 0.0
  %1247 = vmatmul.mubr.f32.gmra.mrb[0].mxu0 %v1070
  %v1248 = vpop.f32.mrb[0].mxu0
  %v1249 = vadd.f32 0.0, %v1248
  %v1250 = vpop.f32.mrb[0].mxu0
  %1251 = vmatprep.mubr.f32.mxu0 0.0
  %1252 = vmatmul.mubr.f32.gmra.mrb[0].mxu0 %v1071
  %v1253 = vpop.f32.mrb[0].mxu0
  %v1254 = vadd.f32 0.0, %v1253
  %v1255 = vpop.f32.mrb[0].mxu0
  %1256 = vmatprep.mubr.f32.mxu0 0.0
  %1257 = vmatmul.mubr.f32.gmra.mrb[0].mxu0 %v1072
  %v1258 = vpop.f32.mrb[0].mxu0
  %v1259 = vadd.f32 0.0, %v1258
  %v1260 = vpop.f32.mrb[0].mxu0
  %1261 = vmatprep.mubr.f32.mxu0 0.0
  %1262 = vmatmul.mubr.f32.gmra.mrb[0].mxu0 %v1073
  %v1263 = vpop.f32.mrb[0].mxu0
  %v1264 = vadd.f32 0.0, %v1263
  %v1265 = vpop.f32.mrb[0].mxu0
  %1266 = vmatprep.mubr.f32.mxu0 0.0
  %1267 = vmatmul.mubr.f32.gmra.mrb[0].mxu0 %v1074
  %v1268 = vpop.f32.mrb[0].mxu0
  %v1269 = vadd.f32 0.0, %v1268
  %v1270 = vpop.f32.mrb[0].mxu0
  %1271 = vmatprep.mubr.f32.mxu0 0.0
  %1272 = vmatmul.mubr.f32.gmra.mrb[0].mxu0 %v1075
  %v1273 = vpop.f32.mrb[0].mxu0
  %v1274 = vadd.f32 0.0, %v1273
  %v1275 = vpop.f32.mrb[0].mxu0
  %1276 = vmatprep.mubr.f32.mxu0 0.0
  %1277 = vmatmul.mubr.f32.gmra.mrb[0].mxu0 %v1076
  %v1278 = vpop.f32.mrb[0].mxu0
  %v1279 = vadd.f32 0.0, %v1278
  %v1280 = vpop.f32.mrb[0].mxu0
  %1281 = vmatprep.mubr.f32.mxu0 0.0
  %1282 = vmatmul.mubr.f32.gmra.mrb[0].mxu0 %v1077
  %v1283 = vpop.f32.mrb[0].mxu0
  %v1284 = vadd.f32 0.0, %v1283
  %v1285 = vpop.f32.mrb[0].mxu0
  %1286 = vmatprep.mubr.f32.mxu0 0.0
  %1287 = vmatmul.mubr.f32.gmra.mrb[0].mxu0 %v1078
  %v1288 = vpop.f32.mrb[0].mxu0
  %v1289 = vadd.f32 0.0, %v1288
  %v1290 = vpop.f32.mrb[0].mxu0
  %1291 = vmatprep.mubr.f32.mxu0 0.0
  %1292 = vmatmul.mubr.f32.gmra.mrb[0].mxu0 %v1079
  %v1293 = vpop.f32.mrb[0].mxu0
  %v1294 = vadd.f32 0.0, %v1293
  %v1295 = vpop.f32.mrb[0].mxu0
  %1296 = vmatprep.mubr.f32.mxu0 0.0
  %1297 = vmatmul.mubr.f32.gmra.mrb[0].mxu0 %v1080
  %v1298 = vpop.f32.mrb[0].mxu0
  %v1299 = vadd.f32 0.0, %v1298
  %v1300 = vpop.f32.mrb[0].mxu0
  %1301 = vmatprep.mubr.f32.mxu0 0.0
  %1302 = vmatmul.mubr.f32.gmra.mrb[0].mxu0 %v1081
  %v1303 = vpop.f32.mrb[0].mxu0
  %v1304 = vadd.f32 0.0, %v1303
  %v1305 = vpop.f32.mrb[0].mxu0
  %1306 = vmatprep.mubr.f32.mxu0 0.0
  %1307 = vmatmul.mubr.f32.gmra.mrb[0].mxu0 %v1082
  %v1308 = vpop.f32.mrb[0].mxu0
  %v1309 = vadd.f32 0.0, %v1308
  %v1310 = vpop.f32.mrb[0].mxu0
  %1311 = vmatprep.mubr.f32.mxu0 0.0
  %1312 = vmatmul.mubr.f32.gmra.mrb[0].mxu0 %v1083
  %v1313 = vpop.f32.mrb[0].mxu0
  %v1314 = vadd.f32 0.0, %v1313
  %v1315 = vpop.f32.mrb[0].mxu0
  %1316 = vmatprep.mubr.f32.mxu0 0.0
  %1317 = vmatmul.mubr.f32.gmra.mrb[0].mxu0 %v1084
  %v1318 = vpop.f32.mrb[0].mxu0
  %v1319 = vadd.f32 0.0, %v1318
  %v1320 = vpop.f32.mrb[0].mxu0
  %1321 = vmatprep.mubr.f32.mxu0 0.0
  %1322 = vmatmul.mubr.f32.gmra.mrb[0].mxu0 %v1085
  %v1323 = vpop.f32.mrb[0].mxu0
  %v1324 = vadd.f32 0.0, %v1323
  %v1325 = vpop.f32.mrb[0].mxu0
  %1326 = vmatprep.mubr.f32.mxu0 0.0
  %1327 = vmatmul.mubr.f32.gmra.mrb[0].mxu0 %v1086
  %v1328 = vpop.f32.mrb[0].mxu0
  %v1329 = vadd.f32 0.0, %v1328
  %v1330 = vpop.f32.mrb[0].mxu0
  %1331 = vmatprep.mubr.f32.mxu0 0.0
  %1332 = vmatmul.mubr.f32.gmra.mrb[0].mxu0 %v1087
  %v1333 = vpop.f32.mrb[0].mxu0
  %v1334 = vadd.f32 0.0, %v1333
  %v1335 = vpop.f32.mrb[0].mxu0
  %1336 = vmatprep.mubr.f32.mxu0 0.0
  %1337 = vmatmul.mubr.f32.gmra.mrb[0].mxu0 %v1088
  %v1338 = vpop.f32.mrb[0].mxu0
  %v1339 = vadd.f32 0.0, %v1338
  %v1340 = vpop.f32.mrb[0].mxu0
  %1341 = vmatprep.mubr.f32.mxu0 0.0
  %1342 = vmatmul.mubr.f32.gmra.mrb[0].mxu0 %v1089
  %v1343 = vpop.f32.mrb[0].mxu0
  %v1344 = vadd.f32 0.0, %v1343
  %v1345 = vpop.f32.mrb[0].mxu0
  %1346 = vmatprep.mubr.f32.mxu0 0.0
  %1347 = vmatmul.mubr.f32.gmra.mrb[0].mxu0 %v1090
  %v1348 = vpop.f32.mrb[0].mxu0
  %v1349 = vadd.f32 0.0, %v1348
  %v1350 = vpop.f32.mrb[0].mxu0
  %1351 = vmatprep.mubr.f32.mxu0 0.0
  %1352 = vmatmul.mubr.f32.gmra.mrb[0].mxu0 %v1091
  %v1353 = vpop.f32.mrb[0].mxu0
  %v1354 = vadd.f32 0.0, %v1353
  %v1355 = vpop.f32.mrb[0].mxu0
  %1356 = vmatprep.mubr.f32.mxu0 0.0
  %1357 = vmatmul.mubr.f32.gmra.mrb[0].mxu0 %v1092
  %v1358 = vpop.f32.mrb[0].mxu0
  %v1359 = vadd.f32 0.0, %v1358
  %v1360 = vpop.f32.mrb[0].mxu0
  %1361 = vmatprep.mubr.f32.mxu0 0.0
  %1362 = vmatmul.mubr.f32.gmra.mrb[0].mxu0 %v1093
  %v1363 = vpop.f32.mrb[0].mxu0
  %v1364 = vadd.f32 0.0, %v1363
  %v1365 = vpop.f32.mrb[0].mxu0
  %1366 = vmatprep.mubr.f32.mxu0 0.0
  %1367 = vmatmul.mubr.f32.gmra.mrb[0].mxu0 %v1094
  %v1368 = vpop.f32.mrb[0].mxu0
  %v1369 = vadd.f32 0.0, %v1368
  %v1370 = vpop.f32.mrb[0].mxu0
  %1371 = vmatprep.mubr.f32.mxu0 0.0
  %1372 = vmatmul.mubr.f32.gmra.mrb[0].mxu0 %v1095
  %v1373 = vpop.f32.mrb[0].mxu0
  %v1374 = vadd.f32 0.0, %v1373
  %v1375 = vpop.f32.mrb[0].mxu0
  %1376 = vmatprep.mubr.f32.mxu0 0.0
  %1377 = vmatmul.mubr.f32.gmra.mrb[0].mxu0 %v1096
  %v1378 = vpop.f32.mrb[0].mxu0
  %v1379 = vadd.f32 0.0, %v1378
  %v1380 = vpop.f32.mrb[0].mxu0
  %1381 = vmatprep.mubr.f32.mxu0 0.0
  %1382 = vmatmul.mubr.f32.gmra.mrb[0].mxu0 %v1097
  %v1383 = vpop.f32.mrb[0].mxu0
  %v1384 = vadd.f32 0.0, %v1383
  %v1385 = vpop.f32.mrb[0].mxu0
  %1386 = vmatprep.mubr.f32.mxu0 0.0
  %1387 = vmatmul.mubr.f32.gmra.mrb[0].mxu0 %v1098
  %v1388 = vpop.f32.mrb[0].mxu0
  %v1389 = vadd.f32 0.0, %v1388
  %v1390 = vpop.f32.mrb[0].mxu0
  %1391 = vmatprep.mubr.f32.mxu0 0.0
  %1392 = vmatmul.mubr.f32.gmra.mrb[0].mxu0 %v1099
  %v1393 = vpop.f32.mrb[0].mxu0
  %v1394 = vadd.f32 0.0, %v1393
  %v1395 = vpop.f32.mrb[0].mxu0
  %1396 = vmatprep.mubr.f32.mxu0 0.0
  %1397 = vmatmul.mubr.f32.gmra.mrb[0].mxu0 %v1100
  %v1398 = vpop.f32.mrb[0].mxu0
  %v1399 = vadd.f32 0.0, %v1398
  %v1400 = vpop.f32.mrb[0].mxu0
  %1401 = vmatprep.mubr.f32.mxu0 0.0
  %1402 = vmatmul.mubr.f32.gmra.mrb[0].mxu0 %v1101
  %v1403 = vpop.f32.mrb[0].mxu0
  %v1404 = vadd.f32 0.0, %v1403
  %v1405 = vpop.f32.mrb[0].mxu0
  %1406 = vmatprep.mubr.f32.mxu0 0.0
  %1407 = vmatmul.mubr.f32.gmra.mrb[0].mxu0 %v1102
  %v1408 = vpop.f32.mrb[0].mxu0
  %v1409 = vadd.f32 0.0, %v1408
  %v1410 = vpop.f32.mrb[0].mxu0
  %1411 = vmatprep.mubr.f32.mxu0 0.0
  %1412 = vmatmul.mubr.f32.gmra.mrb[0].mxu0 %v1103
  %v1413 = vpop.f32.mrb[0].mxu0
  %v1414 = vadd.f32 0.0, %v1413
  %v1415 = vpop.f32.mrb[0].mxu0
  %1416 = vmatprep.mubr.f32.mxu0 0.0
  %1417 = vmatmul.mubr.f32.gmra.mrb[0].mxu0 %v1104
  %v1418 = vpop.f32.mrb[0].mxu0
  %v1419 = vadd.f32 0.0, %v1418
  %v1420 = vpop.f32.mrb[0].mxu0
  %1421 = vmatprep.mubr.f32.mxu0 0.0
  %1422 = vmatmul.mubr.f32.gmra.mrb[0].mxu0 %v1105
  %v1423 = vpop.f32.mrb[0].mxu0
  %v1424 = vadd.f32 0.0, %v1423
  %v1425 = vpop.f32.mrb[0].mxu0
  %1426 = vmatprep.mubr.f32.mxu0 0.0
  %1427 = vmatmul.mubr.f32.gmra.mrb[0].mxu0 %v1106
  %v1428 = vpop.f32.mrb[0].mxu0
  %v1429 = vadd.f32 0.0, %v1428
  %v1430 = vpop.f32.mrb[0].mxu0
  %1431 = vmatprep.mubr.f32.mxu0 0.0
  %1432 = vmatmul.mubr.f32.gmra.mrb[0].mxu0 %v1107
  %v1433 = vpop.f32.mrb[0].mxu0
  %v1434 = vadd.f32 0.0, %v1433
  %v1435 = vpop.f32.mrb[0].mxu0
  %1436 = vmatprep.mubr.f32.mxu0 0.0
  %1437 = vmatmul.mubr.f32.gmra.mrb[0].mxu0 %v1108
  %v1438 = vpop.f32.mrb[0].mxu0
  %v1439 = vadd.f32 0.0, %v1438
  %v1440 = vpop.f32.mrb[0].mxu0
  %1441 = vmatprep.mubr.f32.mxu0 0.0
  %1442 = vmatmul.mubr.f32.gmra.mrb[0].mxu0 %v1109
  %v1443 = vpop.f32.mrb[0].mxu0
  %v1444 = vadd.f32 0.0, %v1443
  %v1445 = vpop.f32.mrb[0].mxu0
  %1446 = vmatprep.mubr.f32.mxu0 0.0
  %1447 = vmatmul.mubr.f32.gmra.mrb[0].mxu0 %v1110
  %v1448 = vpop.f32.mrb[0].mxu0
  %v1449 = vadd.f32 0.0, %v1448
  %v1450 = vpop.f32.mrb[0].mxu0
  %1451 = vmatprep.mubr.f32.mxu0 0.0
  %1452 = vmatmul.mubr.f32.gmra.mrb[0].mxu0 %v1111
  %v1453 = vpop.f32.mrb[0].mxu0
  %v1454 = vadd.f32 0.0, %v1453
  %v1455 = vpop.f32.mrb[0].mxu0
  %1456 = vmatprep.mubr.f32.mxu0 0.0
  %1457 = vmatmul.mubr.f32.gmra.mrb[0].mxu0 %v1112
  %v1458 = vpop.f32.mrb[0].mxu0
  %v1459 = vadd.f32 0.0, %v1458
  %v1460 = vpop.f32.mrb[0].mxu0
  %1461 = vmatprep.mubr.f32.mxu0 0.0
  %1462 = vmatmul.mubr.f32.gmra.mrb[0].mxu0 %v1113
  %v1463 = vpop.f32.mrb[0].mxu0
  %v1464 = vadd.f32 0.0, %v1463
  %v1465 = vpop.f32.mrb[0].mxu0
  %1466 = vmatprep.mubr.f32.mxu0 0.0
  %1467 = vmatmul.mubr.f32.gmra.mrb[0].mxu0 %v1114
  %v1468 = vpop.f32.mrb[0].mxu0
  %v1469 = vadd.f32 0.0, %v1468
  %v1470 = vpop.f32.mrb[0].mxu0
  %1471 = vmatprep.mubr.f32.mxu0 0.0
  %1472 = vmatmul.mubr.f32.gmra.mrb[0].mxu0 %v1115
  %v1473 = vpop.f32.mrb[0].mxu0
  %v1474 = vadd.f32 0.0, %v1473
  %v1475 = vpop.f32.mrb[0].mxu0
  %1476 = vmatprep.mubr.f32.mxu0 0.0
  %1477 = vmatmul.mubr.f32.gmra.mrb[0].mxu0 %v1116
  %v1478 = vpop.f32.mrb[0].mxu0
  %v1479 = vadd.f32 0.0, %v1478
  %v1480 = vpop.f32.mrb[0].mxu0
  %1481 = vmatprep.mubr.f32.mxu0 0.0
  %1482 = vmatmul.mubr.f32.gmra.mrb[0].mxu0 %v1117
  %v1483 = vpop.f32.mrb[0].mxu0
  %v1484 = vadd.f32 0.0, %v1483
  %v1485 = vpop.f32.mrb[0].mxu0
  %1486 = vmatprep.mubr.f32.mxu0 0.0
  %1487 = vmatmul.mubr.f32.gmra.mrb[0].mxu0 %v1118
  %v1488 = vpop.f32.mrb[0].mxu0
  %v1489 = vadd.f32 0.0, %v1488
  %v1490 = vpop.f32.mrb[0].mxu0
  %1491 = vmatprep.mubr.f32.mxu0 0.0
  %1492 = vmatmul.mubr.f32.gmra.mrb[0].mxu0 %v1119
  %v1493 = vpop.f32.mrb[0].mxu0
  %v1494 = vadd.f32 0.0, %v1493
  %v1495 = vpop.f32.mrb[0].mxu0
  %1496 = vmatprep.mubr.f32.mxu0 0.0
  %1497 = vmatmul.mubr.f32.gmra.mrb[0].mxu0 %v1120
  %v1498 = vpop.f32.mrb[0].mxu0
  %v1499 = vadd.f32 0.0, %v1498
  %v1500 = vpop.f32.mrb[0].mxu0
  %1501 = vmatprep.mubr.f32.mxu0 0.0
  %1502 = vmatmul.mubr.f32.gmra.mrb[0].mxu0 %v1121
  %v1503 = vpop.f32.mrb[0].mxu0
  %v1504 = vadd.f32 0.0, %v1503
  %v1505 = vpop.f32.mrb[0].mxu0
  %1506 = vmatprep.mubr.f32.mxu0 0.0
  %1507 = vmatmul.mubr.f32.gmra.mrb[0].mxu0 %v1122
  %v1508 = vpop.f32.mrb[0].mxu0
  %v1509 = vadd.f32 0.0, %v1508
  %v1510 = vpop.f32.mrb[0].mxu0
  %1511 = vmatprep.mubr.f32.mxu0 0.0
  %1512 = vmatmul.mubr.f32.gmra.mrb[0].mxu0 %v1123
  %v1513 = vpop.f32.mrb[0].mxu0
  %v1514 = vadd.f32 0.0, %v1513
  %v1515 = vpop.f32.mrb[0].mxu0
  %1516 = vmatprep.mubr.f32.mxu0 0.0
  %1517 = vmatmul.mubr.f32.gmra.mrb[0].mxu0 %v1124
  %v1518 = vpop.f32.mrb[0].mxu0
  %v1519 = vadd.f32 0.0, %v1518
  %v1520 = vpop.f32.mrb[0].mxu0
  %1521 = vmatprep.mubr.f32.mxu0 0.0
  %1522 = vmatmul.mubr.f32.gmra.mrb[0].mxu0 %v1125
  %v1523 = vpop.f32.mrb[0].mxu0
  %v1524 = vadd.f32 0.0, %v1523
  %v1525 = vpop.f32.mrb[0].mxu0
  %1526 = vdwg.mxu0
  %v1527 = vadd.f32 %v998, %v1209
  %v1528 = vadd.f32 %v999, %v1214
  %v1529 = vadd.f32 %v1000, %v1219
  %v1530 = vadd.f32 %v1001, %v1224
  %v1531 = vadd.f32 %v1002, %v1229
  %v1532 = vadd.f32 %v1003, %v1234
  %v1533 = vadd.f32 %v1004, %v1239
  %v1534 = vadd.f32 %v1005, %v1244
  %v1535 = vadd.f32 %v1006, %v1249
  %v1536 = vadd.f32 %v1007, %v1254
  %v1537 = vadd.f32 %v1008, %v1259
  %v1538 = vadd.f32 %v1009, %v1264
  %v1539 = vadd.f32 %v1010, %v1269
  %v1540 = vadd.f32 %v1011, %v1274
  %v1541 = vadd.f32 %v1012, %v1279
  %v1542 = vadd.f32 %v1013, %v1284
  %v1543 = vadd.f32 %v1014, %v1289
  %v1544 = vadd.f32 %v1015, %v1294
  %v1545 = vadd.f32 %v1016, %v1299
  %v1546 = vadd.f32 %v1017, %v1304
  %v1547 = vadd.f32 %v1018, %v1309
  %v1548 = vadd.f32 %v1019, %v1314
  %v1549 = vadd.f32 %v1020, %v1319
  %v1550 = vadd.f32 %v1021, %v1324
  %v1551 = vadd.f32 %v1022, %v1329
  %v1552 = vadd.f32 %v1023, %v1334
  %v1553 = vadd.f32 %v1024, %v1339
  %v1554 = vadd.f32 %v1025, %v1344
  %v1555 = vadd.f32 %v1026, %v1349
  %v1556 = vadd.f32 %v1027, %v1354
  %v1557 = vadd.f32 %v1028, %v1359
  %v1558 = vadd.f32 %v1029, %v1364
  %v1559 = vadd.f32 %v1030, %v1369
  %v1560 = vadd.f32 %v1031, %v1374
  %v1561 = vadd.f32 %v1032, %v1379
  %v1562 = vadd.f32 %v1033, %v1384
  %v1563 = vadd.f32 %v1034, %v1389
  %v1564 = vadd.f32 %v1035, %v1394
  %v1565 = vadd.f32 %v1036, %v1399
  %v1566 = vadd.f32 %v1037, %v1404
  %v1567 = vadd.f32 %v1038, %v1409
  %v1568 = vadd.f32 %v1039, %v1414
  %v1569 = vadd.f32 %v1040, %v1419
  %v1570 = vadd.f32 %v1041, %v1424
  %v1571 = vadd.f32 %v1042, %v1429
  %v1572 = vadd.f32 %v1043, %v1434
  %v1573 = vadd.f32 %v1044, %v1439
  %v1574 = vadd.f32 %v1045, %v1444
  %v1575 = vadd.f32 %v1046, %v1449
  %v1576 = vadd.f32 %v1047, %v1454
  %v1577 = vadd.f32 %v1048, %v1459
  %v1578 = vadd.f32 %v1049, %v1464
  %v1579 = vadd.f32 %v1050, %v1469
  %v1580 = vadd.f32 %v1051, %v1474
  %v1581 = vadd.f32 %v1052, %v1479
  %v1582 = vadd.f32 %v1053, %v1484
  %v1583 = vadd.f32 %v1054, %v1489
  %v1584 = vadd.f32 %v1055, %v1494
  %v1585 = vadd.f32 %v1056, %v1499
  %v1586 = vadd.f32 %v1057, %v1504
  %v1587 = vadd.f32 %v1058, %v1509
  %v1588 = vadd.f32 %v1059, %v1514
  %v1589 = vadd.f32 %v1060, %v1519
  %v1590 = vadd.f32 %v1061, %v1524
  %v1591 = vld [vmem:[%s4 + $0x1] sm:$0x1]
  %v1592 = vlaneseq
  %v1593 = vshrl.u32 %v1592, 7
  %v1594 = vsub.s32 0, %v1593
  %v1595 = vrot.slane %v1591, %v1594
  %v1596 = vmul.f32 %v1595, %v1062
  %v1597 = vmul.f32 %v1595, %v1063
  %v1598 = vmul.f32 %v1595, %v1064
  %v1599 = vmul.f32 %v1595, %v1065
  %v1600 = vmul.f32 %v1595, %v1066
  %v1601 = vmul.f32 %v1595, %v1067
  %v1602 = vmul.f32 %v1595, %v1068
  %v1603 = vmul.f32 %v1595, %v1069
  %v1604 = vmul.f32 %v1595, %v1070
  %v1605 = vmul.f32 %v1595, %v1071
  %v1606 = vmul.f32 %v1595, %v1072
  %v1607 = vmul.f32 %v1595, %v1073
  %v1608 = vmul.f32 %v1595, %v1074
  %v1609 = vmul.f32 %v1595, %v1075
  %v1610 = vmul.f32 %v1595, %v1076
  %v1611 = vmul.f32 %v1595, %v1077
  %v1612 = vmul.f32 %v1595, %v1078
  %v1613 = vmul.f32 %v1595, %v1079
  %v1614 = vmul.f32 %v1595, %v1080
  %v1615 = vmul.f32 %v1595, %v1081
  %v1616 = vmul.f32 %v1595, %v1082
  %v1617 = vmul.f32 %v1595, %v1083
  %v1618 = vmul.f32 %v1595, %v1084
  %v1619 = vmul.f32 %v1595, %v1085
  %v1620 = vmul.f32 %v1595, %v1086
  %v1621 = vmul.f32 %v1595, %v1087
  %v1622 = vmul.f32 %v1595, %v1088
  %v1623 = vmul.f32 %v1595, %v1089
  %v1624 = vmul.f32 %v1595, %v1090
  %v1625 = vmul.f32 %v1595, %v1091
  %v1626 = vmul.f32 %v1595, %v1092
  %v1627 = vmul.f32 %v1595, %v1093
  %v1628 = vmul.f32 %v1595, %v1094
  %v1629 = vmul.f32 %v1595, %v1095
  %v1630 = vmul.f32 %v1595, %v1096
  %v1631 = vmul.f32 %v1595, %v1097
  %v1632 = vmul.f32 %v1595, %v1098
  %v1633 = vmul.f32 %v1595, %v1099
  %v1634 = vmul.f32 %v1595, %v1100
  %v1635 = vmul.f32 %v1595, %v1101
  %v1636 = vmul.f32 %v1595, %v1102
  %v1637 = vmul.f32 %v1595, %v1103
  %v1638 = vmul.f32 %v1595, %v1104
  %v1639 = vmul.f32 %v1595, %v1105
  %v1640 = vmul.f32 %v1595, %v1106
  %v1641 = vmul.f32 %v1595, %v1107
  %v1642 = vmul.f32 %v1595, %v1108
  %v1643 = vmul.f32 %v1595, %v1109
  %v1644 = vmul.f32 %v1595, %v1110
  %v1645 = vmul.f32 %v1595, %v1111
  %v1646 = vmul.f32 %v1595, %v1112
  %v1647 = vmul.f32 %v1595, %v1113
  %v1648 = vmul.f32 %v1595, %v1114
  %v1649 = vmul.f32 %v1595, %v1115
  %v1650 = vmul.f32 %v1595, %v1116
  %v1651 = vmul.f32 %v1595, %v1117
  %v1652 = vmul.f32 %v1595, %v1118
  %v1653 = vmul.f32 %v1595, %v1119
  %v1654 = vmul.f32 %v1595, %v1120
  %v1655 = vmul.f32 %v1595, %v1121
  %v1656 = vmul.f32 %v1595, %v1122
  %v1657 = vmul.f32 %v1595, %v1123
  %v1658 = vmul.f32 %v1595, %v1124
  %v1659 = vmul.f32 %v1595, %v1125
  %v1660 = vld [vmem:[%s5 + $0x1] sm:$0x1]
  %v1661 = vtanh.pop %v1527
  %v1662 = vtanh.pop %v1528
  %v1663 = vtanh.pop %v1529
  %v1664 = vtanh.pop %v1530
  %v1665 = vtanh.pop %v1531
  %v1666 = vtanh.pop %v1532
  %v1667 = vtanh.pop %v1533
  %v1668 = vtanh.pop %v1534
  %v1669 = vtanh.pop %v1535
  %v1670 = vtanh.pop %v1536
  %v1671 = vtanh.pop %v1537
  %v1672 = vtanh.pop %v1538
  %v1673 = vtanh.pop %v1539
  %v1674 = vtanh.pop %v1540
  %v1675 = vtanh.pop %v1541
  %v1676 = vtanh.pop %v1542
  %v1677 = vtanh.pop %v1543
  %v1678 = vtanh.pop %v1544
  %v1679 = vtanh.pop %v1545
  %v1680 = vtanh.pop %v1546
  %v1681 = vtanh.pop %v1547
  %v1682 = vtanh.pop %v1548
  %v1683 = vtanh.pop %v1549
  %v1684 = vtanh.pop %v1550
  %v1685 = vtanh.pop %v1551
  %v1686 = vtanh.pop %v1552
  %v1687 = vtanh.pop %v1553
  %v1688 = vtanh.pop %v1554
  %v1689 = vtanh.pop %v1555
  %v1690 = vtanh.pop %v1556
  %v1691 = vtanh.pop %v1557
  %v1692 = vtanh.pop %v1558
  %v1693 = vtanh.pop %v1559
  %v1694 = vtanh.pop %v1560
  %v1695 = vtanh.pop %v1561
  %v1696 = vtanh.pop %v1562
  %v1697 = vtanh.pop %v1563
  %v1698 = vtanh.pop %v1564
  %v1699 = vtanh.pop %v1565
  %v1700 = vtanh.pop %v1566
  %v1701 = vtanh.pop %v1567
  %v1702 = vtanh.pop %v1568
  %v1703 = vtanh.pop %v1569
  %v1704 = vtanh.pop %v1570
  %v1705 = vtanh.pop %v1571
  %v1706 = vtanh.pop %v1572
  %v1707 = vtanh.pop %v1573
  %v1708 = vtanh.pop %v1574
  %v1709 = vtanh.pop %v1575
  %v1710 = vtanh.pop %v1576
  %v1711 = vtanh.pop %v1577
  %v1712 = vtanh.pop %v1578
  %v1713 = vtanh.pop %v1579
  %v1714 = vtanh.pop %v1580
  %v1715 = vtanh.pop %v1581
  %v1716 = vtanh.pop %v1582
  %v1717 = vtanh.pop %v1583
  %v1718 = vtanh.pop %v1584
  %v1719 = vtanh.pop %v1585
  %v1720 = vtanh.pop %v1586
  %v1721 = vtanh.pop %v1587
  %v1722 = vtanh.pop %v1588
  %v1723 = vtanh.pop %v1589
  %v1724 = vtanh.pop %v1590
  %v1725 = vadd.f32 %v1661, 1.0
  %v1726 = vadd.f32 %v1662, 1.0
  %v1727 = vadd.f32 %v1663, 1.0
  %v1728 = vadd.f32 %v1664, 1.0
  %v1729 = vadd.f32 %v1665, 1.0
  %v1730 = vadd.f32 %v1666, 1.0
  %v1731 = vadd.f32 %v1667, 1.0
  %v1732 = vadd.f32 %v1668, 1.0
  %v1733 = vadd.f32 %v1669, 1.0
  %v1734 = vadd.f32 %v1670, 1.0
  %v1735 = vadd.f32 %v1671, 1.0
  %v1736 = vadd.f32 %v1672, 1.0
  %v1737 = vadd.f32 %v1673, 1.0
  %v1738 = vadd.f32 %v1674, 1.0
  %v1739 = vadd.f32 %v1675, 1.0
  %v1740 = vadd.f32 %v1676, 1.0
  %v1741 = vadd.f32 %v1677, 1.0
  %v1742 = vadd.f32 %v1678, 1.0
  %v1743 = vadd.f32 %v1679, 1.0
  %v1744 = vadd.f32 %v1680, 1.0
  %v1745 = vadd.f32 %v1681, 1.0
  %v1746 = vadd.f32 %v1682, 1.0
  %v1747 = vadd.f32 %v1683, 1.0
  %v1748 = vadd.f32 %v1684, 1.0
  %v1749 = vadd.f32 %v1685, 1.0
  %v1750 = vadd.f32 %v1686, 1.0
  %v1751 = vadd.f32 %v1687, 1.0
  %v1752 = vadd.f32 %v1688, 1.0
  %v1753 = vadd.f32 %v1689, 1.0
  %v1754 = vadd.f32 %v1690, 1.0
  %v1755 = vadd.f32 %v1691, 1.0
  %v1756 = vadd.f32 %v1692, 1.0
  %v1757 = vadd.f32 %v1693, 1.0
  %v1758 = vadd.f32 %v1694, 1.0
  %v1759 = vadd.f32 %v1695, 1.0
  %v1760 = vadd.f32 %v1696, 1.0
  %v1761 = vadd.f32 %v1697, 1.0
  %v1762 = vadd.f32 %v1698, 1.0
  %v1763 = vadd.f32 %v1699, 1.0
  %v1764 = vadd.f32 %v1700, 1.0
  %v1765 = vadd.f32 %v1701, 1.0
  %v1766 = vadd.f32 %v1702, 1.0
  %v1767 = vadd.f32 %v1703, 1.0
  %v1768 = vadd.f32 %v1704, 1.0
  %v1769 = vadd.f32 %v1705, 1.0
  %v1770 = vadd.f32 %v1706, 1.0
  %v1771 = vadd.f32 %v1707, 1.0
  %v1772 = vadd.f32 %v1708, 1.0
  %v1773 = vadd.f32 %v1709, 1.0
  %v1774 = vadd.f32 %v1710, 1.0
  %v1775 = vadd.f32 %v1711, 1.0
  %v1776 = vadd.f32 %v1712, 1.0
  %v1777 = vadd.f32 %v1713, 1.0
  %v1778 = vadd.f32 %v1714, 1.0
  %v1779 = vadd.f32 %v1715, 1.0
  %v1780 = vadd.f32 %v1716, 1.0
  %v1781 = vadd.f32 %v1717, 1.0
  %v1782 = vadd.f32 %v1718, 1.0
  %v1783 = vadd.f32 %v1719, 1.0
  %v1784 = vadd.f32 %v1720, 1.0
  %v1785 = vadd.f32 %v1721, 1.0
  %v1786 = vadd.f32 %v1722, 1.0
  %v1787 = vadd.f32 %v1723, 1.0
  %v1788 = vadd.f32 %v1724, 1.0
  %v1789 = vlaneseq
  %v1790 = vshrl.u32 %v1789, 7
  %v1791 = vsub.s32 0, %v1790
  %v1792 = vrot.slane %v1660, %v1791
  %v1793 = vmul.f32 %v1792, %v1725
  %v1794 = vmul.f32 %v1792, %v1726
  %v1795 = vmul.f32 %v1792, %v1727
  %v1796 = vmul.f32 %v1792, %v1728
  %v1797 = vmul.f32 %v1792, %v1729
  %v1798 = vmul.f32 %v1792, %v1730
  %v1799 = vmul.f32 %v1792, %v1731
  %v1800 = vmul.f32 %v1792, %v1732
  %v1801 = vmul.f32 %v1792, %v1733
  %v1802 = vmul.f32 %v1792, %v1734
  %v1803 = vmul.f32 %v1792, %v1735
  %v1804 = vmul.f32 %v1792, %v1736
  %v1805 = vmul.f32 %v1792, %v1737
  %v1806 = vmul.f32 %v1792, %v1738
  %v1807 = vmul.f32 %v1792, %v1739
  %v1808 = vmul.f32 %v1792, %v1740
  %v1809 = vmul.f32 %v1792, %v1741
  %v1810 = vmul.f32 %v1792, %v1742
  %v1811 = vmul.f32 %v1792, %v1743
  %v1812 = vmul.f32 %v1792, %v1744
  %v1813 = vmul.f32 %v1792, %v1745
  %v1814 = vmul.f32 %v1792, %v1746
  %v1815 = vmul.f32 %v1792, %v1747
  %v1816 = vmul.f32 %v1792, %v1748
  %v1817 = vmul.f32 %v1792, %v1749
  %v1818 = vmul.f32 %v1792, %v1750
  %v1819 = vmul.f32 %v1792, %v1751
  %v1820 = vmul.f32 %v1792, %v1752
  %v1821 = vmul.f32 %v1792, %v1753
  %v1822 = vmul.f32 %v1792, %v1754
  %v1823 = vmul.f32 %v1792, %v1755
  %v1824 = vmul.f32 %v1792, %v1756
  %v1825 = vmul.f32 %v1792, %v1757
  %v1826 = vmul.f32 %v1792, %v1758
  %v1827 = vmul.f32 %v1792, %v1759
  %v1828 = vmul.f32 %v1792, %v1760
  %v1829 = vmul.f32 %v1792, %v1761
  %v1830 = vmul.f32 %v1792, %v1762
  %v1831 = vmul.f32 %v1792, %v1763
  %v1832 = vmul.f32 %v1792, %v1764
  %v1833 = vmul.f32 %v1792, %v1765
  %v1834 = vmul.f32 %v1792, %v1766
  %v1835 = vmul.f32 %v1792, %v1767
  %v1836 = vmul.f32 %v1792, %v1768
  %v1837 = vmul.f32 %v1792, %v1769
  %v1838 = vmul.f32 %v1792, %v1770
  %v1839 = vmul.f32 %v1792, %v1771
  %v1840 = vmul.f32 %v1792, %v1772
  %v1841 = vmul.f32 %v1792, %v1773
  %v1842 = vmul.f32 %v1792, %v1774
  %v1843 = vmul.f32 %v1792, %v1775
  %v1844 = vmul.f32 %v1792, %v1776
  %v1845 = vmul.f32 %v1792, %v1777
  %v1846 = vmul.f32 %v1792, %v1778
  %v1847 = vmul.f32 %v1792, %v1779
  %v1848 = vmul.f32 %v1792, %v1780
  %v1849 = vmul.f32 %v1792, %v1781
  %v1850 = vmul.f32 %v1792, %v1782
  %v1851 = vmul.f32 %v1792, %v1783
  %v1852 = vmul.f32 %v1792, %v1784
  %v1853 = vmul.f32 %v1792, %v1785
  %v1854 = vmul.f32 %v1792, %v1786
  %v1855 = vmul.f32 %v1792, %v1787
  %v1856 = vmul.f32 %v1792, %v1788
  %v1857 = vadd.f32 %v1596, %v1793
  %v1858 = vadd.f32 %v1597, %v1794
  %v1859 = vadd.f32 %v1598, %v1795
  %v1860 = vadd.f32 %v1599, %v1796
  %v1861 = vadd.f32 %v1600, %v1797
  %v1862 = vadd.f32 %v1601, %v1798
  %v1863 = vadd.f32 %v1602, %v1799
  %v1864 = vadd.f32 %v1603, %v1800
  %v1865 = vadd.f32 %v1604, %v1801
  %v1866 = vadd.f32 %v1605, %v1802
  %v1867 = vadd.f32 %v1606, %v1803
  %v1868 = vadd.f32 %v1607, %v1804
  %v1869 = vadd.f32 %v1608, %v1805
  %v1870 = vadd.f32 %v1609, %v1806
  %v1871 = vadd.f32 %v1610, %v1807
  %v1872 = vadd.f32 %v1611, %v1808
  %v1873 = vadd.f32 %v1612, %v1809
  %v1874 = vadd.f32 %v1613, %v1810
  %v1875 = vadd.f32 %v1614, %v1811
  %v1876 = vadd.f32 %v1615, %v1812
  %v1877 = vadd.f32 %v1616, %v1813
  %v1878 = vadd.f32 %v1617, %v1814
  %v1879 = vadd.f32 %v1618, %v1815
  %v1880 = vadd.f32 %v1619, %v1816
  %v1881 = vadd.f32 %v1620, %v1817
  %v1882 = vadd.f32 %v1621, %v1818
  %v1883 = vadd.f32 %v1622, %v1819
  %v1884 = vadd.f32 %v1623, %v1820
  %v1885 = vadd.f32 %v1624, %v1821
  %v1886 = vadd.f32 %v1625, %v1822
  %v1887 = vadd.f32 %v1626, %v1823
  %v1888 = vadd.f32 %v1627, %v1824
  %v1889 = vadd.f32 %v1628, %v1825
  %v1890 = vadd.f32 %v1629, %v1826
  %v1891 = vadd.f32 %v1630, %v1827
  %v1892 = vadd.f32 %v1631, %v1828
  %v1893 = vadd.f32 %v1632, %v1829
  %v1894 = vadd.f32 %v1633, %v1830
  %v1895 = vadd.f32 %v1634, %v1831
  %v1896 = vadd.f32 %v1635, %v1832
  %v1897 = vadd.f32 %v1636, %v1833
  %v1898 = vadd.f32 %v1637, %v1834
  %v1899 = vadd.f32 %v1638, %v1835
  %v1900 = vadd.f32 %v1639, %v1836
  %v1901 = vadd.f32 %v1640, %v1837
  %v1902 = vadd.f32 %v1641, %v1838
  %v1903 = vadd.f32 %v1642, %v1839
  %v1904 = vadd.f32 %v1643, %v1840
  %v1905 = vadd.f32 %v1644, %v1841
  %v1906 = vadd.f32 %v1645, %v1842
  %v1907 = vadd.f32 %v1646, %v1843
  %v1908 = vadd.f32 %v1647, %v1844
  %v1909 = vadd.f32 %v1648, %v1845
  %v1910 = vadd.f32 %v1649, %v1846
  %v1911 = vadd.f32 %v1650, %v1847
  %v1912 = vadd.f32 %v1651, %v1848
  %v1913 = vadd.f32 %v1652, %v1849
  %v1914 = vadd.f32 %v1653, %v1850
  %v1915 = vadd.f32 %v1654, %v1851
  %v1916 = vadd.f32 %v1655, %v1852
  %v1917 = vadd.f32 %v1656, %v1853
  %v1918 = vadd.f32 %v1657, %v1854
  %v1919 = vadd.f32 %v1658, %v1855
  %v1920 = vadd.f32 %v1659, %v1856
  %1921 = vst [vmem:[#allocation3] sm:$0xff] %v1857
  %1922 = vst [vmem:[#allocation3 + $0x8] sm:$0xff] %v1858
  %1923 = vst [vmem:[#allocation3 + $0x10] sm:$0xff] %v1859
  %1924 = vst [vmem:[#allocation3 + $0x18] sm:$0xff] %v1860
  %1925 = vst [vmem:[#allocation3 + $0x20] sm:$0xff] %v1861
  %1926 = vst [vmem:[#allocation3 + $0x28] sm:$0xff] %v1862
  %1927 = vst [vmem:[#allocation3 + $0x30] sm:$0xff] %v1863
  %1928 = vst [vmem:[#allocation3 + $0x38] sm:$0xff] %v1864
  %1929 = vst [vmem:[#allocation3 + $0x40] sm:$0xff] %v1865
  %1930 = vst [vmem:[#allocation3 + $0x48] sm:$0xff] %v1866
  %1931 = vst [vmem:[#allocation3 + $0x50] sm:$0xff] %v1867
  %1932 = vst [vmem:[#allocation3 + $0x58] sm:$0xff] %v1868
  %1933 = vst [vmem:[#allocation3 + $0x60] sm:$0xff] %v1869
  %1934 = vst [vmem:[#allocation3 + $0x68] sm:$0xff] %v1870
  %1935 = vst [vmem:[#allocation3 + $0x70] sm:$0xff] %v1871
  %1936 = vst [vmem:[#allocation3 + $0x78] sm:$0xff] %v1872
  %1937 = vst [vmem:[#allocation3 + $0x80] sm:$0xff] %v1873
  %1938 = vst [vmem:[#allocation3 + $0x88] sm:$0xff] %v1874
  %1939 = vst [vmem:[#allocation3 + $0x90] sm:$0xff] %v1875
  %1940 = vst [vmem:[#allocation3 + $0x98] sm:$0xff] %v1876
  %1941 = vst [vmem:[#allocation3 + $0xa0] sm:$0xff] %v1877
  %1942 = vst [vmem:[#allocation3 + $0xa8] sm:$0xff] %v1878
  %1943 = vst [vmem:[#allocation3 + $0xb0] sm:$0xff] %v1879
  %1944 = vst [vmem:[#allocation3 + $0xb8] sm:$0xff] %v1880
  %1945 = vst [vmem:[#allocation3 + $0xc0] sm:$0xff] %v1881
  %1946 = vst [vmem:[#allocation3 + $0xc8] sm:$0xff] %v1882
  %1947 = vst [vmem:[#allocation3 + $0xd0] sm:$0xff] %v1883
  %1948 = vst [vmem:[#allocation3 + $0xd8] sm:$0xff] %v1884
  %1949 = vst [vmem:[#allocation3 + $0xe0] sm:$0xff] %v1885
  %1950 = vst [vmem:[#allocation3 + $0xe8] sm:$0xff] %v1886
  %1951 = vst [vmem:[#allocation3 + $0xf0] sm:$0xff] %v1887
  %1952 = vst [vmem:[#allocation3 + $0xf8] sm:$0xff] %v1888
  %1953 = vst [vmem:[#allocation3 + $0x100] sm:$0xff] %v1889
  %1954 = vst [vmem:[#allocation3 + $0x108] sm:$0xff] %v1890
  %1955 = vst [vmem:[#allocation3 + $0x110] sm:$0xff] %v1891
  %1956 = vst [vmem:[#allocation3 + $0x118] sm:$0xff] %v1892
  %1957 = vst [vmem:[#allocation3 + $0x120] sm:$0xff] %v1893
  %1958 = vst [vmem:[#allocation3 + $0x128] sm:$0xff] %v1894
  %1959 = vst [vmem:[#allocation3 + $0x130] sm:$0xff] %v1895
  %1960 = vst [vmem:[#allocation3 + $0x138] sm:$0xff] %v1896
  %1961 = vst [vmem:[#allocation3 + $0x140] sm:$0xff] %v1897
  %1962 = vst [vmem:[#allocation3 + $0x148] sm:$0xff] %v1898
  %1963 = vst [vmem:[#allocation3 + $0x150] sm:$0xff] %v1899
  %1964 = vst [vmem:[#allocation3 + $0x158] sm:$0xff] %v1900
  %1965 = vst [vmem:[#allocation3 + $0x160] sm:$0xff] %v1901
  %1966 = vst [vmem:[#allocation3 + $0x168] sm:$0xff] %v1902
  %1967 = vst [vmem:[#allocation3 + $0x170] sm:$0xff] %v1903
  %1968 = vst [vmem:[#allocation3 + $0x178] sm:$0xff] %v1904
  %1969 = vst [vmem:[#allocation3 + $0x180] sm:$0xff] %v1905
  %1970 = vst [vmem:[#allocation3 + $0x188] sm:$0xff] %v1906
  %1971 = vst [vmem:[#allocation3 + $0x190] sm:$0xff] %v1907
  %1972 = vst [vmem:[#allocation3 + $0x198] sm:$0xff] %v1908
  %1973 = vst [vmem:[#allocation3 + $0x1a0] sm:$0xff] %v1909
  %1974 = vst [vmem:[#allocation3 + $0x1a8] sm:$0xff] %v1910
  %1975 = vst [vmem:[#allocation3 + $0x1b0] sm:$0xff] %v1911
  %1976 = vst [vmem:[#allocation3 + $0x1b8] sm:$0xff] %v1912
  %1977 = vst [vmem:[#allocation3 + $0x1c0] sm:$0xff] %v1913
  %1978 = vst [vmem:[#allocation3 + $0x1c8] sm:$0xff] %v1914
  %1979 = vst [vmem:[#allocation3 + $0x1d0] sm:$0xff] %v1915
  %1980 = vst [vmem:[#allocation3 + $0x1d8] sm:$0xff] %v1916
  %1981 = vst [vmem:[#allocation3 + $0x1e0] sm:$0xff] %v1917
  %1982 = vst [vmem:[#allocation3 + $0x1e8] sm:$0xff] %v1918
  %1983 = vst [vmem:[#allocation3 + $0x1f0] sm:$0xff] %v1919
  %1984 = vst [vmem:[#allocation3 + $0x1f8] sm:$0xff] %v1920
  %v1985 = vld [vmem:[#allocation3] sm:$0xff]
  %v1986 = vld [vmem:[#allocation3 + $0x8] sm:$0xff]
  %v1987 = vld [vmem:[#allocation3 + $0x10] sm:$0xff]
  %v1988 = vld [vmem:[#allocation3 + $0x18] sm:$0xff]
  %v1989 = vld [vmem:[#allocation3 + $0x20] sm:$0xff]
  %v1990 = vld [vmem:[#allocation3 + $0x28] sm:$0xff]
  %v1991 = vld [vmem:[#allocation3 + $0x30] sm:$0xff]
  %v1992 = vld [vmem:[#allocation3 + $0x38] sm:$0xff]
  %v1993 = vld [vmem:[#allocation3 + $0x40] sm:$0xff]
  %v1994 = vld [vmem:[#allocation3 + $0x48] sm:$0xff]
  %v1995 = vld [vmem:[#allocation3 + $0x50] sm:$0xff]
  %v1996 = vld [vmem:[#allocation3 + $0x58] sm:$0xff]
  %v1997 = vld [vmem:[#allocation3 + $0x60] sm:$0xff]
  %v1998 = vld [vmem:[#allocation3 + $0x68] sm:$0xff]
  %v1999 = vld [vmem:[#allocation3 + $0x70] sm:$0xff]
  %v2000 = vld [vmem:[#allocation3 + $0x78] sm:$0xff]
  %v2001 = vld [vmem:[#allocation3 + $0x80] sm:$0xff]
  %v2002 = vld [vmem:[#allocation3 + $0x88] sm:$0xff]
  %v2003 = vld [vmem:[#allocation3 + $0x90] sm:$0xff]
  %v2004 = vld [vmem:[#allocation3 + $0x98] sm:$0xff]
  %v2005 = vld [vmem:[#allocation3 + $0xa0] sm:$0xff]
  %v2006 = vld [vmem:[#allocation3 + $0xa8] sm:$0xff]
  %v2007 = vld [vmem:[#allocation3 + $0xb0] sm:$0xff]
  %v2008 = vld [vmem:[#allocation3 + $0xb8] sm:$0xff]
  %v2009 = vld [vmem:[#allocation3 + $0xc0] sm:$0xff]
  %v2010 = vld [vmem:[#allocation3 + $0xc8] sm:$0xff]
  %v2011 = vld [vmem:[#allocation3 + $0xd0] sm:$0xff]
  %v2012 = vld [vmem:[#allocation3 + $0xd8] sm:$0xff]
  %v2013 = vld [vmem:[#allocation3 + $0xe0] sm:$0xff]
  %v2014 = vld [vmem:[#allocation3 + $0xe8] sm:$0xff]
  %v2015 = vld [vmem:[#allocation3 + $0xf0] sm:$0xff]
  %v2016 = vld [vmem:[#allocation3 + $0xf8] sm:$0xff]
  %v2017 = vld [vmem:[#allocation3 + $0x100] sm:$0xff]
  %v2018 = vld [vmem:[#allocation3 + $0x108] sm:$0xff]
  %v2019 = vld [vmem:[#allocation3 + $0x110] sm:$0xff]
  %v2020 = vld [vmem:[#allocation3 + $0x118] sm:$0xff]
  %v2021 = vld [vmem:[#allocation3 + $0x120] sm:$0xff]
  %v2022 = vld [vmem:[#allocation3 + $0x128] sm:$0xff]
  %v2023 = vld [vmem:[#allocation3 + $0x130] sm:$0xff]
  %v2024 = vld [vmem:[#allocation3 + $0x138] sm:$0xff]
  %v2025 = vld [vmem:[#allocation3 + $0x140] sm:$0xff]
  %v2026 = vld [vmem:[#allocation3 + $0x148] sm:$0xff]
  %v2027 = vld [vmem:[#allocation3 + $0x150] sm:$0xff]
  %v2028 = vld [vmem:[#allocation3 + $0x158] sm:$0xff]
  %v2029 = vld [vmem:[#allocation3 + $0x160] sm:$0xff]
  %v2030 = vld [vmem:[#allocation3 + $0x168] sm:$0xff]
  %v2031 = vld [vmem:[#allocation3 + $0x170] sm:$0xff]
  %v2032 = vld [vmem:[#allocation3 + $0x178] sm:$0xff]
  %v2033 = vld [vmem:[#allocation3 + $0x180] sm:$0xff]
  %v2034 = vld [vmem:[#allocation3 + $0x188] sm:$0xff]
  %v2035 = vld [vmem:[#allocation3 + $0x190] sm:$0xff]
  %v2036 = vld [vmem:[#allocation3 + $0x198] sm:$0xff]
  %v2037 = vld [vmem:[#allocation3 + $0x1a0] sm:$0xff]
  %v2038 = vld [vmem:[#allocation3 + $0x1a8] sm:$0xff]
  %v2039 = vld [vmem:[#allocation3 + $0x1b0] sm:$0xff]
  %v2040 = vld [vmem:[#allocation3 + $0x1b8] sm:$0xff]
  %v2041 = vld [vmem:[#allocation3 + $0x1c0] sm:$0xff]
  %v2042 = vld [vmem:[#allocation3 + $0x1c8] sm:$0xff]
  %v2043 = vld [vmem:[#allocation3 + $0x1d0] sm:$0xff]
  %v2044 = vld [vmem:[#allocation3 + $0x1d8] sm:$0xff]
  %v2045 = vld [vmem:[#allocation3 + $0x1e0] sm:$0xff]
  %v2046 = vld [vmem:[#allocation3 + $0x1e8] sm:$0xff]
  %v2047 = vld [vmem:[#allocation3 + $0x1f0] sm:$0xff]
  %v2048 = vld [vmem:[#allocation3 + $0x1f8] sm:$0xff]
  %2113 = vrot.lane.b32.xlu0 %v1985, 124
  %v2114 = vpop.permute.xlu0 %2113
  %2115 = vrot.lane.b32.xlu0 %v1986, 124
  %v2116 = vpop.permute.xlu0 %2115
  %2117 = vrot.lane.b32.xlu0 %v1987, 124
  %v2118 = vpop.permute.xlu0 %2117
  %2119 = vrot.lane.b32.xlu0 %v1988, 124
  %v2120 = vpop.permute.xlu0 %2119
  %2121 = vrot.lane.b32.xlu0 %v1989, 124
  %v2122 = vpop.permute.xlu0 %2121
  %2123 = vrot.lane.b32.xlu0 %v1990, 124
  %v2124 = vpop.permute.xlu0 %2123
  %2125 = vrot.lane.b32.xlu0 %v1991, 124
  %v2126 = vpop.permute.xlu0 %2125
  %2127 = vrot.lane.b32.xlu0 %v1992, 124
  %v2128 = vpop.permute.xlu0 %2127
  %2129 = vrot.lane.b32.xlu0 %v1993, 124
  %v2130 = vpop.permute.xlu0 %2129
  %2131 = vrot.lane.b32.xlu0 %v1994, 124
  %v2132 = vpop.permute.xlu0 %2131
  %2133 = vrot.lane.b32.xlu0 %v1995, 124
  %v2134 = vpop.permute.xlu0 %2133
  %2135 = vrot.lane.b32.xlu0 %v1996, 124
  %v2136 = vpop.permute.xlu0 %2135
  %2137 = vrot.lane.b32.xlu0 %v1997, 124
  %v2138 = vpop.permute.xlu0 %2137
  %2139 = vrot.lane.b32.xlu0 %v1998, 124
  %v2140 = vpop.permute.xlu0 %2139
  %2141 = vrot.lane.b32.xlu0 %v1999, 124
  %v2142 = vpop.permute.xlu0 %2141
  %2143 = vrot.lane.b32.xlu0 %v2000, 124
  %v2144 = vpop.permute.xlu0 %2143
  %2145 = vrot.lane.b32.xlu0 %v2001, 124
  %v2146 = vpop.permute.xlu0 %2145
  %2147 = vrot.lane.b32.xlu0 %v2002, 124
  %v2148 = vpop.permute.xlu0 %2147
  %2149 = vrot.lane.b32.xlu0 %v2003, 124
  %v2150 = vpop.permute.xlu0 %2149
  %2151 = vrot.lane.b32.xlu0 %v2004, 124
  %v2152 = vpop.permute.xlu0 %2151
  %2153 = vrot.lane.b32.xlu0 %v2005, 124
  %v2154 = vpop.permute.xlu0 %2153
  %2155 = vrot.lane.b32.xlu0 %v2006, 124
  %v2156 = vpop.permute.xlu0 %2155
  %2157 = vrot.lane.b32.xlu0 %v2007, 124
  %v2158 = vpop.permute.xlu0 %2157
  %2159 = vrot.lane.b32.xlu0 %v2008, 124
  %v2160 = vpop.permute.xlu0 %2159
  %2161 = vrot.lane.b32.xlu0 %v2009, 124
  %v2162 = vpop.permute.xlu0 %2161
  %2163 = vrot.lane.b32.xlu0 %v2010, 124
  %v2164 = vpop.permute.xlu0 %2163
  %2165 = vrot.lane.b32.xlu0 %v2011, 124
  %v2166 = vpop.permute.xlu0 %2165
  %2167 = vrot.lane.b32.xlu0 %v2012, 124
  %v2168 = vpop.permute.xlu0 %2167
  %2169 = vrot.lane.b32.xlu0 %v2013, 124
  %v2170 = vpop.permute.xlu0 %2169
  %2171 = vrot.lane.b32.xlu0 %v2014, 124
  %v2172 = vpop.permute.xlu0 %2171
  %2173 = vrot.lane.b32.xlu0 %v2015, 124
  %v2174 = vpop.permute.xlu0 %2173
  %2175 = vrot.lane.b32.xlu0 %v2016, 124
  %v2176 = vpop.permute.xlu0 %2175
  %2177 = vrot.lane.b32.xlu0 %v2017, 124
  %v2178 = vpop.permute.xlu0 %2177
  %2179 = vrot.lane.b32.xlu0 %v2018, 124
  %v2180 = vpop.permute.xlu0 %2179
  %2181 = vrot.lane.b32.xlu0 %v2019, 124
  %v2182 = vpop.permute.xlu0 %2181
  %2183 = vrot.lane.b32.xlu0 %v2020, 124
  %v2184 = vpop.permute.xlu0 %2183
  %2185 = vrot.lane.b32.xlu0 %v2021, 124
  %v2186 = vpop.permute.xlu0 %2185
  %2187 = vrot.lane.b32.xlu0 %v2022, 124
  %v2188 = vpop.permute.xlu0 %2187
  %2189 = vrot.lane.b32.xlu0 %v2023, 124
  %v2190 = vpop.permute.xlu0 %2189
  %2191 = vrot.lane.b32.xlu0 %v2024, 124
  %v2192 = vpop.permute.xlu0 %2191
  %2193 = vrot.lane.b32.xlu0 %v2025, 124
  %v2194 = vpop.permute.xlu0 %2193
  %2195 = vrot.lane.b32.xlu0 %v2026, 124
  %v2196 = vpop.permute.xlu0 %2195
  %2197 = vrot.lane.b32.xlu0 %v2027, 124
  %v2198 = vpop.permute.xlu0 %2197
  %2199 = vrot.lane.b32.xlu0 %v2028, 124
  %v2200 = vpop.permute.xlu0 %2199
  %2201 = vrot.lane.b32.xlu0 %v2029, 124
  %v2202 = vpop.permute.xlu0 %2201
  %2203 = vrot.lane.b32.xlu0 %v2030, 124
  %v2204 = vpop.permute.xlu0 %2203
  %2205 = vrot.lane.b32.xlu0 %v2031, 124
  %v2206 = vpop.permute.xlu0 %2205
  %2207 = vrot.lane.b32.xlu0 %v2032, 124
  %v2208 = vpop.permute.xlu0 %2207
  %2209 = vrot.lane.b32.xlu0 %v2033, 124
  %v2210 = vpop.permute.xlu0 %2209
  %2211 = vrot.lane.b32.xlu0 %v2034, 124
  %v2212 = vpop.permute.xlu0 %2211
  %2213 = vrot.lane.b32.xlu0 %v2035, 124
  %v2214 = vpop.permute.xlu0 %2213
  %2215 = vrot.lane.b32.xlu0 %v2036, 124
  %v2216 = vpop.permute.xlu0 %2215
  %2217 = vrot.lane.b32.xlu0 %v2037, 124
  %v2218 = vpop.permute.xlu0 %2217
  %2219 = vrot.lane.b32.xlu0 %v2038, 124
  %v2220 = vpop.permute.xlu0 %2219
  %2221 = vrot.lane.b32.xlu0 %v2039, 124
  %v2222 = vpop.permute.xlu0 %2221
  %2223 = vrot.lane.b32.xlu0 %v2040, 124
  %v2224 = vpop.permute.xlu0 %2223
  %2225 = vrot.lane.b32.xlu0 %v2041, 124
  %v2226 = vpop.permute.xlu0 %2225
  %2227 = vrot.lane.b32.xlu0 %v2042, 124
  %v2228 = vpop.permute.xlu0 %2227
  %2229 = vrot.lane.b32.xlu0 %v2043, 124
  %v2230 = vpop.permute.xlu0 %2229
  %2231 = vrot.lane.b32.xlu0 %v2044, 124
  %v2232 = vpop.permute.xlu0 %2231
  %2233 = vrot.lane.b32.xlu0 %v2045, 124
  %v2234 = vpop.permute.xlu0 %2233
  %2235 = vrot.lane.b32.xlu0 %v2046, 124
  %v2236 = vpop.permute.xlu0 %2235
  %2237 = vrot.lane.b32.xlu0 %v2047, 124
  %v2238 = vpop.permute.xlu0 %2237
  %2239 = vrot.lane.b32.xlu0 %v2048, 124
  %v2240 = vpop.permute.xlu0 %2239
  %vm2305 = vcmask 15360
  %2306 = vst.msk [vmem:[%s6] sm:$0xff] %vm2305, %v2114
  %2307 = vst.msk [vmem:[%s6 + $0x8] sm:$0xff] %vm2305, %v2116
  %2308 = vst.msk [vmem:[%s6 + $0x10] sm:$0xff] %vm2305, %v2118
  %2309 = vst.msk [vmem:[%s6 + $0x18] sm:$0xff] %vm2305, %v2120
  %2310 = vst.msk [vmem:[%s6 + $0x20] sm:$0xff] %vm2305, %v2122
  %2311 = vst.msk [vmem:[%s6 + $0x28] sm:$0xff] %vm2305, %v2124
  %2312 = vst.msk [vmem:[%s6 + $0x30] sm:$0xff] %vm2305, %v2126
  %2313 = vst.msk [vmem:[%s6 + $0x38] sm:$0xff] %vm2305, %v2128
  %2314 = vst.msk [vmem:[%s6 + $0x40] sm:$0xff] %vm2305, %v2130
  %2315 = vst.msk [vmem:[%s6 + $0x48] sm:$0xff] %vm2305, %v2132
  %2316 = vst.msk [vmem:[%s6 + $0x50] sm:$0xff] %vm2305, %v2134
  %2317 = vst.msk [vmem:[%s6 + $0x58] sm:$0xff] %vm2305, %v2136
  %2318 = vst.msk [vmem:[%s6 + $0x60] sm:$0xff] %vm2305, %v2138
  %2319 = vst.msk [vmem:[%s6 + $0x68] sm:$0xff] %vm2305, %v2140
  %2320 = vst.msk [vmem:[%s6 + $0x70] sm:$0xff] %vm2305, %v2142
  %2321 = vst.msk [vmem:[%s6 + $0x78] sm:$0xff] %vm2305, %v2144
  %2322 = vst.msk [vmem:[%s6 + $0x80] sm:$0xff] %vm2305, %v2146
  %2323 = vst.msk [vmem:[%s6 + $0x88] sm:$0xff] %vm2305, %v2148
  %2324 = vst.msk [vmem:[%s6 + $0x90] sm:$0xff] %vm2305, %v2150
  %2325 = vst.msk [vmem:[%s6 + $0x98] sm:$0xff] %vm2305, %v2152
  %2326 = vst.msk [vmem:[%s6 + $0xa0] sm:$0xff] %vm2305, %v2154
  %2327 = vst.msk [vmem:[%s6 + $0xa8] sm:$0xff] %vm2305, %v2156
  %2328 = vst.msk [vmem:[%s6 + $0xb0] sm:$0xff] %vm2305, %v2158
  %2329 = vst.msk [vmem:[%s6 + $0xb8] sm:$0xff] %vm2305, %v2160
  %2330 = vst.msk [vmem:[%s6 + $0xc0] sm:$0xff] %vm2305, %v2162
  %2331 = vst.msk [vmem:[%s6 + $0xc8] sm:$0xff] %vm2305, %v2164
  %2332 = vst.msk [vmem:[%s6 + $0xd0] sm:$0xff] %vm2305, %v2166
  %2333 = vst.msk [vmem:[%s6 + $0xd8] sm:$0xff] %vm2305, %v2168
  %2334 = vst.msk [vmem:[%s6 + $0xe0] sm:$0xff] %vm2305, %v2170
  %2335 = vst.msk [vmem:[%s6 + $0xe8] sm:$0xff] %vm2305, %v2172
  %2336 = vst.msk [vmem:[%s6 + $0xf0] sm:$0xff] %vm2305, %v2174
  %2337 = vst.msk [vmem:[%s6 + $0xf8] sm:$0xff] %vm2305, %v2176
  %2338 = vst.msk [vmem:[%s6 + $0x100] sm:$0xff] %vm2305, %v2178
  %2339 = vst.msk [vmem:[%s6 + $0x108] sm:$0xff] %vm2305, %v2180
  %2340 = vst.msk [vmem:[%s6 + $0x110] sm:$0xff] %vm2305, %v2182
  %2341 = vst.msk [vmem:[%s6 + $0x118] sm:$0xff] %vm2305, %v2184
  %2342 = vst.msk [vmem:[%s6 + $0x120] sm:$0xff] %vm2305, %v2186
  %2343 = vst.msk [vmem:[%s6 + $0x128] sm:$0xff] %vm2305, %v2188
  %2344 = vst.msk [vmem:[%s6 + $0x130] sm:$0xff] %vm2305, %v2190
  %2345 = vst.msk [vmem:[%s6 + $0x138] sm:$0xff] %vm2305, %v2192
  %2346 = vst.msk [vmem:[%s6 + $0x140] sm:$0xff] %vm2305, %v2194
  %2347 = vst.msk [vmem:[%s6 + $0x148] sm:$0xff] %vm2305, %v2196
  %2348 = vst.msk [vmem:[%s6 + $0x150] sm:$0xff] %vm2305, %v2198
  %2349 = vst.msk [vmem:[%s6 + $0x158] sm:$0xff] %vm2305, %v2200
  %2350 = vst.msk [vmem:[%s6 + $0x160] sm:$0xff] %vm2305, %v2202
  %2351 = vst.msk [vmem:[%s6 + $0x168] sm:$0xff] %vm2305, %v2204
  %2352 = vst.msk [vmem:[%s6 + $0x170] sm:$0xff] %vm2305, %v2206
  %2353 = vst.msk [vmem:[%s6 + $0x178] sm:$0xff] %vm2305, %v2208
  %2354 = vst.msk [vmem:[%s6 + $0x180] sm:$0xff] %vm2305, %v2210
  %2355 = vst.msk [vmem:[%s6 + $0x188] sm:$0xff] %vm2305, %v2212
  %2356 = vst.msk [vmem:[%s6 + $0x190] sm:$0xff] %vm2305, %v2214
  %2357 = vst.msk [vmem:[%s6 + $0x198] sm:$0xff] %vm2305, %v2216
  %2358 = vst.msk [vmem:[%s6 + $0x1a0] sm:$0xff] %vm2305, %v2218
  %2359 = vst.msk [vmem:[%s6 + $0x1a8] sm:$0xff] %vm2305, %v2220
  %2360 = vst.msk [vmem:[%s6 + $0x1b0] sm:$0xff] %vm2305, %v2222
  %2361 = vst.msk [vmem:[%s6 + $0x1b8] sm:$0xff] %vm2305, %v2224
  %2362 = vst.msk [vmem:[%s6 + $0x1c0] sm:$0xff] %vm2305, %v2226
  %2363 = vst.msk [vmem:[%s6 + $0x1c8] sm:$0xff] %vm2305, %v2228
  %2364 = vst.msk [vmem:[%s6 + $0x1d0] sm:$0xff] %vm2305, %v2230
  %2365 = vst.msk [vmem:[%s6 + $0x1d8] sm:$0xff] %vm2305, %v2232
  %2366 = vst.msk [vmem:[%s6 + $0x1e0] sm:$0xff] %vm2305, %v2234
  %2367 = vst.msk [vmem:[%s6 + $0x1e8] sm:$0xff] %vm2305, %v2236
  %2368 = vst.msk [vmem:[%s6 + $0x1f0] sm:$0xff] %vm2305, %v2238
  %2369 = vst.msk [vmem:[%s6 + $0x1f8] sm:$0xff] %vm2305, %v2240
  // Predicated region
  $region26: #{tpu_custom_call.1} parent=0 // pred_check
    _
  $region27: #{tpu_custom_call.1} parent=0 // pred_check_branch
    %2371 = sbr.rel (0) target = $region29
  $region28: #{tpu_custom_call.1} parent=0 // pred_region
    _
  $region29: #{tpu_custom_call.1} parent=0 // pred_fallthru
    _
  // Predicated region
  $region30: #{tpu_custom_call.1} parent=0 // pred_check
    _
  $region31: #{tpu_custom_call.1} parent=0 // pred_check_branch
    %2373 = sbr.rel (0) target = $region33
  $region32: #{tpu_custom_call.1} parent=0 // pred_region
    _
  $region33: #{tpu_custom_call.1} parent=0 // pred_fallthru
    _

</llo_original>
